<compile_context>
chip_gen: v6e
topology: v6e:2x2x1
jax: 0.10.0
libtpu: 0.0.40
codegen_flags: <defaults>
</compile_context>

<pallas_src>
import functools

import jax
import jax.numpy as jnp
from jax.experimental import pallas as pl
from jax.experimental.pallas import tpu as pltpu

# ---------------- config (consistent with SiglipVisionConfig fields) ---------
HIDDEN = 64          # config.hidden_size
INTER = 128          # config.intermediate_size
NUM_HEADS = 4        # config.num_attention_heads
HEAD_DIM = HIDDEN // NUM_HEADS
EPS = 1e-6           # config.layer_norm_eps
BATCH = 2
SEQ = 16
SCALE = HEAD_DIM ** (-0.5)


# ---------------- Pallas kernel: whole encoder layer, single invocation ------
def encoder_layer_kernel(
    x_ref,
    ln1_w_ref, ln1_b_ref,
    w_qkv_ref, b_qkv_ref,
    w_o_ref, b_o_ref,
    ln2_w_ref, ln2_b_ref,
    fc1_w_ref, fc1_b_ref,
    fc2_w_ref, fc2_b_ref,
    o_ref,
    *, batch, seq, num_heads, eps,
):
    m, d = x_ref.shape                 # (B*S, D)
    head_dim = d // num_heads
    scale = head_dim ** (-0.5)
    inter = fc1_w_ref.shape[1]

    # ---- hoisted loads (mlp()/layer_norm() are traced more than once) -------
    x = x_ref[...]                                     # (M, D)  f32
    ln1_w, ln1_b = ln1_w_ref[...], ln1_b_ref[...]      # (1, D)  f32
    ln2_w, ln2_b = ln2_w_ref[...], ln2_b_ref[...]
    w_qkv = w_qkv_ref[...]                             # (D, 3D) bf16
    b_qkv = b_qkv_ref[...]                             # (1, 3D) f32
    w_o = w_o_ref[...]                                 # (D, D)  bf16
    b_o = b_o_ref[...]                                 # (1, D)  f32
    w1, w2 = fc1_w_ref[...], fc2_w_ref[...]            # bf16
    # broadcast the twice-used MLP biases exactly once (JAX does not CSE
    # broadcast_in_dim, and mlp() is traced twice).
    b1 = jnp.broadcast_to(fc1_b_ref[...], (m, inter))  # (M, I) f32
    b2 = jnp.broadcast_to(fc2_b_ref[...], (m, d))      # (M, D) f32

    def layer_norm(h, w, b):                           # f32 throughout
        mu = jnp.mean(h, axis=-1, keepdims=True)
        var = jnp.mean(jnp.square(h - mu), axis=-1, keepdims=True)
        return (h - mu) * jax.lax.rsqrt(var + eps) * w + b

    def mlp(h):                                        # bf16 MXU operands, f32 acc
        h1 = jnp.dot(h.astype(jnp.bfloat16), w1,
                     preferred_element_type=jnp.float32) + b1
        h1 = jax.nn.gelu(h1, approximate=True)         # tanh GELU, f32
        return jnp.dot(h1.astype(jnp.bfloat16), w2,
                       preferred_element_type=jnp.float32) + b2

    # ---- residual branch 1: LN1 -> self-attention ---------------------------
    residual = x
    h = layer_norm(x, ln1_w, ln1_b)

    # fused Q/K/V projection: one (M, D) @ (D, 3D) matmul instead of three
    qkv = jnp.dot(h.astype(jnp.bfloat16), w_qkv,
                  preferred_element_type=jnp.float32) + b_qkv      # (M, 3D) f32
    qkv3 = qkv.reshape(batch, seq, 3 * d)   # leading-dim split only (no relayout)

    # per-head attention, batched over B; accumulate each head's output
    # projection (ctx_h @ Wo[h]) instead of concatenating heads.
    attn = jnp.zeros((m, d), jnp.float32)
    for hd in range(num_heads):
        lo = hd * head_dim
        qh = qkv3[:, :, lo:lo + head_dim]                           # (B, S, Dh)
        kh = qkv3[:, :, d + lo:d + lo + head_dim]
        vh = qkv3[:, :, 2 * d + lo:2 * d + lo + head_dim]
        s = jnp.einsum("bqd,bkd->bqk", qh, kh,
                       preferred_element_type=jnp.float32) * scale  # (B, S, S)
        s_max = jnp.max(s, axis=-1, keepdims=True)
        e = jnp.exp(s - s_max)                                      # f32 softmax
        p = e * pl.reciprocal(jnp.sum(e, axis=-1, keepdims=True), approx=True)
        ctx = jnp.einsum("bqk,bkd->bqd", p, vh,
                         preferred_element_type=jnp.float32)        # (B, S, Dh)
        attn = attn + jnp.dot(
            ctx.reshape(m, head_dim).astype(jnp.bfloat16),          # leading merge
            w_o[lo:lo + head_dim, :],
            preferred_element_type=jnp.float32)                     # (M, D)
    h = residual + attn + b_o

    # ---- residual branch 2: MLP -> LN2 -> MLP (as written in the module) ----
    residual2 = h
    h = mlp(h)
    h = layer_norm(h, ln2_w, ln2_b)
    h = mlp(h)
    o_ref[...] = residual2 + h


@jax.jit
def siglip_encoder_layer(x, params):
    B, S, D = x.shape
    M = B * S

    # Fuse Q/K/V; cast all matmul weights to bf16 (halves weight bytes,
    # native MXU rate on v5e/v6e/v7x).  Biases / LN params stay f32.
    w_qkv = jnp.concatenate(
        [params["wq"], params["wk"], params["wv"]], axis=1).astype(jnp.bfloat16)
    b_qkv = jnp.concatenate([params["bq"], params["bk"], params["bv"]], axis=1)

    kernel = functools.partial(
        encoder_layer_kernel, batch=B, seq=S, num_heads=NUM_HEADS, eps=EPS)

    vmem = pl.BlockSpec(memory_space=pltpu.MemorySpace.VMEM)  # whole array in VMEM
    out = pl.pallas_call(
        kernel,
        out_shape=jax.ShapeDtypeStruct((M, D), x.dtype),
        in_specs=[vmem] * 13,
        out_specs=vmem,
    )(
        x.reshape(M, D),
        params["ln1_w"], params["ln1_b"],
        w_qkv, b_qkv,
        params["wo"].astype(jnp.bfloat16), params["bo"],
        params["ln2_w"], params["ln2_b"],
        params["fc1_w"].astype(jnp.bfloat16), params["fc1_b"],
        params["fc2_w"].astype(jnp.bfloat16), params["fc2_b"],
    )
    return out.reshape(B, S, D)


# ---------------- pure-JAX f32 reference (mirrors the torch forward) --------
def reference(x, p):
    def ln(h, w, b):
        mu = h.mean(-1, keepdims=True)
        var = ((h - mu) ** 2).mean(-1, keepdims=True)
        return (h - mu) / jnp.sqrt(var + EPS) * w + b

    def mlp(h):
        h1 = jax.nn.gelu(h @ p["fc1_w"] + p["fc1_b"], approximate=True)
        return h1 @ p["fc2_w"] + p["fc2_b"]

    B, S, D = x.shape
    r = x
    h = ln(x, p["ln1_w"], p["ln1_b"])
    q = (h @ p["wq"] + p["bq"]).reshape(B, S, NUM_HEADS, HEAD_DIM).transpose(0, 2, 1, 3)
    k = (h @ p["wk"] + p["bk"]).reshape(B, S, NUM_HEADS, HEAD_DIM).transpose(0, 2, 1, 3)
    v = (h @ p["wv"] + p["bv"]).reshape(B, S, NUM_HEADS, HEAD_DIM).transpose(0, 2, 1, 3)
    scores = jnp.einsum("bhqd,bhkd->bhqk", q, k) * SCALE
    probs = jax.nn.softmax(scores.astype(jnp.float32), axis=-1)
    ctx = jnp.einsum("bhqk,bhkd->bhqd", probs, v).transpose(0, 2, 1, 3).reshape(B, S, D)
    attn_out = ctx @ p["wo"] + p["bo"]
    h = r + attn_out
    r2 = h
    h = mlp(h)
    h = ln(h, p["ln2_w"], p["ln2_b"])
    h = mlp(h)
    return r2 + h


# ---------------- deterministic parameter construction ----------------------
def make_params(key):
    ks = jax.random.split(key, 16)
    sd = 0.02
    return {
        "ln1_w": 1.0 + sd * jax.random.normal(ks[0], (1, HIDDEN), jnp.float32),
        "ln1_b": sd * jax.random.normal(ks[1], (1, HIDDEN), jnp.float32),
        "wq": sd * jax.random.normal(ks[2], (HIDDEN, HIDDEN), jnp.float32),
        "bq": sd * jax.random.normal(ks[3], (1, HIDDEN), jnp.float32),
        "wk": sd * jax.random.normal(ks[4], (HIDDEN, HIDDEN), jnp.float32),
        "bk": sd * jax.random.normal(ks[5], (1, HIDDEN), jnp.float32),
        "wv": sd * jax.random.normal(ks[6], (HIDDEN, HIDDEN), jnp.float32),
        "bv": sd * jax.random.normal(ks[7], (1, HIDDEN), jnp.float32),
        "wo": sd * jax.random.normal(ks[8], (HIDDEN, HIDDEN), jnp.float32),
        "bo": sd * jax.random.normal(ks[9], (1, HIDDEN), jnp.float32),
        "ln2_w": 1.0 + sd * jax.random.normal(ks[10], (1, HIDDEN), jnp.float32),
        "ln2_b": sd * jax.random.normal(ks[11], (1, HIDDEN), jnp.float32),
        "fc1_w": sd * jax.random.normal(ks[12], (HIDDEN, INTER), jnp.float32),
        "fc1_b": sd * jax.random.normal(ks[13], (1, INTER), jnp.float32),
        "fc2_w": sd * jax.random.normal(ks[14], (INTER, HIDDEN), jnp.float32),
        "fc2_b": sd * jax.random.normal(ks[15], (1, HIDDEN), jnp.float32),
    }


if __name__ == "__main__":
    key = jax.random.PRNGKey(0)
    k_x, k_p = jax.random.split(key)
    x = jax.random.normal(k_x, (BATCH, SEQ, HIDDEN), jnp.float32)
    params = make_params(k_p)

    out = jax.block_until_ready(siglip_encoder_layer(x, params))
    ref = jax.block_until_ready(reference(x, params))

    assert out.shape == (BATCH, SEQ, HIDDEN)
    err = float(jnp.max(jnp.abs(out - ref)))
    # bf16 MXU operands (f32 accumulation) => slightly relaxed tolerance against
    # the pure-f32 reference.
    assert jnp.allclose(out, ref, atol=5e-3, rtol=5e-3), err

    print("KERNEL_OK")
</pallas_src>

<mosaic_0001>
module attributes {stable_mosaic.version = 11 : i64} {
  func.func @encoder_layer_kernel(%arg0: memref<32x64xf32, #tpu.memory_space<vmem>>, %arg1: memref<1x64xf32, #tpu.memory_space<vmem>>, %arg2: memref<1x64xf32, #tpu.memory_space<vmem>>, %arg3: memref<64x192xbf16, #tpu.memory_space<vmem>>, %arg4: memref<1x192xf32, #tpu.memory_space<vmem>>, %arg5: memref<64x64xbf16, #tpu.memory_space<vmem>>, %arg6: memref<1x64xf32, #tpu.memory_space<vmem>>, %arg7: memref<1x64xf32, #tpu.memory_space<vmem>>, %arg8: memref<1x64xf32, #tpu.memory_space<vmem>>, %arg9: memref<64x128xbf16, #tpu.memory_space<vmem>>, %arg10: memref<1x128xf32, #tpu.memory_space<vmem>>, %arg11: memref<128x64xbf16, #tpu.memory_space<vmem>>, %arg12: memref<1x64xf32, #tpu.memory_space<vmem>>, %arg13: memref<32x64xf32, #tpu.memory_space<vmem>>) attributes {dimension_semantics = [], scalar_prefetch = 0 : i64, scratch_operands = 0 : i64, tpu.core_type = #tpu.core_type<tc>} {
    %c0 = arith.constant 0 : index
    %c0_0 = arith.constant 0 : index
    %0 = vector.load %arg0[%c0, %c0_0] : memref<32x64xf32, #tpu.memory_space<vmem>>, vector<32x64xf32>
    %c0_1 = arith.constant 0 : index
    %c0_2 = arith.constant 0 : index
    %1 = vector.load %arg1[%c0_1, %c0_2] : memref<1x64xf32, #tpu.memory_space<vmem>>, vector<1x64xf32>
    %c0_3 = arith.constant 0 : index
    %c0_4 = arith.constant 0 : index
    %2 = vector.load %arg2[%c0_3, %c0_4] : memref<1x64xf32, #tpu.memory_space<vmem>>, vector<1x64xf32>
    %c0_5 = arith.constant 0 : index
    %c0_6 = arith.constant 0 : index
    %3 = vector.load %arg7[%c0_5, %c0_6] : memref<1x64xf32, #tpu.memory_space<vmem>>, vector<1x64xf32>
    %c0_7 = arith.constant 0 : index
    %c0_8 = arith.constant 0 : index
    %4 = vector.load %arg8[%c0_7, %c0_8] : memref<1x64xf32, #tpu.memory_space<vmem>>, vector<1x64xf32>
    %c0_9 = arith.constant 0 : index
    %c0_10 = arith.constant 0 : index
    %5 = vector.load %arg3[%c0_9, %c0_10] : memref<64x192xbf16, #tpu.memory_space<vmem>>, vector<64x192xbf16>
    %c0_11 = arith.constant 0 : index
    %c0_12 = arith.constant 0 : index
    %6 = vector.load %arg4[%c0_11, %c0_12] : memref<1x192xf32, #tpu.memory_space<vmem>>, vector<1x192xf32>
    %c0_13 = arith.constant 0 : index
    %c0_14 = arith.constant 0 : index
    %7 = vector.load %arg5[%c0_13, %c0_14] : memref<64x64xbf16, #tpu.memory_space<vmem>>, vector<64x64xbf16>
    %c0_15 = arith.constant 0 : index
    %c0_16 = arith.constant 0 : index
    %8 = vector.load %arg6[%c0_15, %c0_16] : memref<1x64xf32, #tpu.memory_space<vmem>>, vector<1x64xf32>
    %c0_17 = arith.constant 0 : index
    %c0_18 = arith.constant 0 : index
    %9 = vector.load %arg9[%c0_17, %c0_18] : memref<64x128xbf16, #tpu.memory_space<vmem>>, vector<64x128xbf16>
    %c0_19 = arith.constant 0 : index
    %c0_20 = arith.constant 0 : index
    %10 = vector.load %arg11[%c0_19, %c0_20] : memref<128x64xbf16, #tpu.memory_space<vmem>>, vector<128x64xbf16>
    %c0_21 = arith.constant 0 : index
    %c0_22 = arith.constant 0 : index
    %11 = vector.load %arg10[%c0_21, %c0_22] : memref<1x128xf32, #tpu.memory_space<vmem>>, vector<1x128xf32>
    %12 = vector.shape_cast %11 : vector<1x128xf32> to vector<1x128xf32>
    %13 = vector.broadcast %12 : vector<1x128xf32> to vector<32x128xf32>
    %c0_23 = arith.constant 0 : index
    %c0_24 = arith.constant 0 : index
    %14 = vector.load %arg12[%c0_23, %c0_24] : memref<1x64xf32, #tpu.memory_space<vmem>>, vector<1x64xf32>
    %15 = vector.shape_cast %14 : vector<1x64xf32> to vector<1x64xf32>
    %16 = vector.broadcast %15 : vector<1x64xf32> to vector<32x64xf32>
    %cst = arith.constant dense<0.000000e+00> : vector<32xf32>
    %17 = vector.multi_reduction <add>, %0, %cst [1] : vector<32x64xf32> to vector<32xf32>
    %18 = vector.shape_cast %17 : vector<32xf32> to vector<32x1xf32>
    %cst_25 = arith.constant 6.400000e+01 : f32
    %19 = vector.broadcast %cst_25 : f32 to vector<32x1xf32>
    %20 = arith.divf %18, %19 : vector<32x1xf32>
    %21 = vector.broadcast %20 : vector<32x1xf32> to vector<32x64xf32>
    %22 = arith.subf %0, %21 : vector<32x64xf32>
    %23 = arith.mulf %22, %22 : vector<32x64xf32>
    %cst_26 = arith.constant dense<0.000000e+00> : vector<32xf32>
    %24 = vector.multi_reduction <add>, %23, %cst_26 [1] : vector<32x64xf32> to vector<32xf32>
    %25 = vector.shape_cast %24 : vector<32xf32> to vector<32x1xf32>
    %cst_27 = arith.constant 6.400000e+01 : f32
    %26 = vector.broadcast %cst_27 : f32 to vector<32x1xf32>
    %27 = arith.divf %25, %26 : vector<32x1xf32>
    %28 = vector.broadcast %20 : vector<32x1xf32> to vector<32x64xf32>
    %29 = arith.subf %0, %28 : vector<32x64xf32>
    %cst_28 = arith.constant 9.99999997E-7 : f32
    %30 = vector.broadcast %cst_28 : f32 to vector<32x1xf32>
    %31 = arith.addf %27, %30 : vector<32x1xf32>
    %32 = math.rsqrt %31 : vector<32x1xf32>
    %33 = vector.broadcast %32 : vector<32x1xf32> to vector<32x64xf32>
    %34 = arith.mulf %29, %33 : vector<32x64xf32>
    %35 = vector.broadcast %1 : vector<1x64xf32> to vector<32x64xf32>
    %36 = arith.mulf %34, %35 : vector<32x64xf32>
    %37 = vector.broadcast %2 : vector<1x64xf32> to vector<32x64xf32>
    %38 = arith.addf %36, %37 : vector<32x64xf32>
    %39 = arith.truncf %38 : vector<32x64xf32> to vector<32x64xbf16>
    %cst_29 = arith.constant dense<0.000000e+00> : vector<32x192xf32>
    %40 = tpu.matmul %39, %5, %cst_29 {dimension_numbers = #tpu.dot_dimension_numbers<[1], [0], [0], [1], [0, 0, 1, 1], [], []>} : vector<32x64xbf16>, vector<64x192xbf16>, vector<32x192xf32> -> vector<32x192xf32>
    %41 = vector.broadcast %6 : vector<1x192xf32> to vector<32x192xf32>
    %42 = arith.addf %40, %41 : vector<32x192xf32>
    %43 = vector.shape_cast %42 : vector<32x192xf32> to vector<2x16x192xf32>
    %cst_30 = arith.constant 0.000000e+00 : f32
    %44 = vector.broadcast %cst_30 : f32 to vector<32x64xf32>
    %45 = vector.extract_strided_slice %43 {offsets = [0, 0, 0], sizes = [2, 16, 16], strides = [1, 1, 1]} : vector<2x16x192xf32> to vector<2x16x16xf32>
    %46 = vector.extract_strided_slice %43 {offsets = [0, 0, 64], sizes = [2, 16, 16], strides = [1, 1, 1]} : vector<2x16x192xf32> to vector<2x16x16xf32>
    %47 = vector.extract_strided_slice %43 {offsets = [0, 0, 128], sizes = [2, 16, 16], strides = [1, 1, 1]} : vector<2x16x192xf32> to vector<2x16x16xf32>
    "tpu.trace_start"() <{level = 10 : i32, message = "bqd,bkd->bqk"}> : () -> ()
    %cst_31 = arith.constant dense<0.000000e+00> : vector<2x16x16xf32>
    %48 = tpu.matmul %45, %46, %cst_31 {dimension_numbers = #tpu.dot_dimension_numbers<[2], [2], [1], [1], [0, 0, 0, 1, 1, 1], [0], [0]>} : vector<2x16x16xf32>, vector<2x16x16xf32>, vector<2x16x16xf32> -> vector<2x16x16xf32>
    "tpu.trace_stop"() : () -> ()
    %cst_32 = arith.constant 2.500000e-01 : f32
    %49 = vector.broadcast %cst_32 : f32 to vector<2x16x16xf32>
    %50 = arith.mulf %48, %49 : vector<2x16x16xf32>
    %cst_33 = arith.constant dense<0xFF800000> : vector<2x16xf32>
    %51 = vector.multi_reduction <maximumf>, %50, %cst_33 [2] : vector<2x16x16xf32> to vector<2x16xf32>
    %52 = vector.shape_cast %51 : vector<2x16xf32> to vector<2x16x1xf32>
    %53 = vector.broadcast %52 : vector<2x16x1xf32> to vector<2x16x16xf32>
    %54 = arith.subf %50, %53 : vector<2x16x16xf32>
    %55 = math.exp %54 : vector<2x16x16xf32>
    %cst_34 = arith.constant dense<0.000000e+00> : vector<2x16xf32>
    %56 = vector.multi_reduction <add>, %55, %cst_34 [2] : vector<2x16x16xf32> to vector<2x16xf32>
    %57 = vector.shape_cast %56 : vector<2x16xf32> to vector<2x16x1xf32>
    %58 = tpu.reciprocal %57 {approx = true} : vector<2x16x1xf32> -> vector<2x16x1xf32>
    %59 = vector.broadcast %58 : vector<2x16x1xf32> to vector<2x16x16xf32>
    %60 = arith.mulf %55, %59 : vector<2x16x16xf32>
    "tpu.trace_start"() <{level = 10 : i32, message = "bqk,bkd->bqd"}> : () -> ()
    %cst_35 = arith.constant dense<0.000000e+00> : vector<2x16x16xf32>
    %61 = tpu.matmul %60, %47, %cst_35 {dimension_numbers = #tpu.dot_dimension_numbers<[2], [1], [1], [2], [0, 0, 0, 1, 1, 2], [0], [0]>} : vector<2x16x16xf32>, vector<2x16x16xf32>, vector<2x16x16xf32> -> vector<2x16x16xf32>
    "tpu.trace_stop"() : () -> ()
    %62 = vector.shape_cast %61 : vector<2x16x16xf32> to vector<32x16xf32>
    %63 = arith.truncf %62 : vector<32x16xf32> to vector<32x16xbf16>
    %64 = vector.extract_strided_slice %7 {offsets = [0, 0], sizes = [16, 64], strides = [1, 1]} : vector<64x64xbf16> to vector<16x64xbf16>
    %cst_36 = arith.constant dense<0.000000e+00> : vector<32x64xf32>
    %65 = tpu.matmul %63, %64, %cst_36 {dimension_numbers = #tpu.dot_dimension_numbers<[1], [0], [0], [1], [0, 0, 1, 1], [], []>} : vector<32x16xbf16>, vector<16x64xbf16>, vector<32x64xf32> -> vector<32x64xf32>
    %66 = arith.addf %44, %65 : vector<32x64xf32>
    %67 = vector.extract_strided_slice %43 {offsets = [0, 0, 16], sizes = [2, 16, 16], strides = [1, 1, 1]} : vector<2x16x192xf32> to vector<2x16x16xf32>
    %68 = vector.extract_strided_slice %43 {offsets = [0, 0, 80], sizes = [2, 16, 16], strides = [1, 1, 1]} : vector<2x16x192xf32> to vector<2x16x16xf32>
    %69 = vector.extract_strided_slice %43 {offsets = [0, 0, 144], sizes = [2, 16, 16], strides = [1, 1, 1]} : vector<2x16x192xf32> to vector<2x16x16xf32>
    "tpu.trace_start"() <{level = 10 : i32, message = "bqd,bkd->bqk"}> : () -> ()
    %cst_37 = arith.constant dense<0.000000e+00> : vector<2x16x16xf32>
    %70 = tpu.matmul %67, %68, %cst_37 {dimension_numbers = #tpu.dot_dimension_numbers<[2], [2], [1], [1], [0, 0, 0, 1, 1, 1], [0], [0]>} : vector<2x16x16xf32>, vector<2x16x16xf32>, vector<2x16x16xf32> -> vector<2x16x16xf32>
    "tpu.trace_stop"() : () -> ()
    %cst_38 = arith.constant 2.500000e-01 : f32
    %71 = vector.broadcast %cst_38 : f32 to vector<2x16x16xf32>
    %72 = arith.mulf %70, %71 : vector<2x16x16xf32>
    %cst_39 = arith.constant dense<0xFF800000> : vector<2x16xf32>
    %73 = vector.multi_reduction <maximumf>, %72, %cst_39 [2] : vector<2x16x16xf32> to vector<2x16xf32>
    %74 = vector.shape_cast %73 : vector<2x16xf32> to vector<2x16x1xf32>
    %75 = vector.broadcast %74 : vector<2x16x1xf32> to vector<2x16x16xf32>
    %76 = arith.subf %72, %75 : vector<2x16x16xf32>
    %77 = math.exp %76 : vector<2x16x16xf32>
    %cst_40 = arith.constant dense<0.000000e+00> : vector<2x16xf32>
    %78 = vector.multi_reduction <add>, %77, %cst_40 [2] : vector<2x16x16xf32> to vector<2x16xf32>
    %79 = vector.shape_cast %78 : vector<2x16xf32> to vector<2x16x1xf32>
    %80 = tpu.reciprocal %79 {approx = true} : vector<2x16x1xf32> -> vector<2x16x1xf32>
    %81 = vector.broadcast %80 : vector<2x16x1xf32> to vector<2x16x16xf32>
    %82 = arith.mulf %77, %81 : vector<2x16x16xf32>
    "tpu.trace_start"() <{level = 10 : i32, message = "bqk,bkd->bqd"}> : () -> ()
    %cst_41 = arith.constant dense<0.000000e+00> : vector<2x16x16xf32>
    %83 = tpu.matmul %82, %69, %cst_41 {dimension_numbers = #tpu.dot_dimension_numbers<[2], [1], [1], [2], [0, 0, 0, 1, 1, 2], [0], [0]>} : vector<2x16x16xf32>, vector<2x16x16xf32>, vector<2x16x16xf32> -> vector<2x16x16xf32>
    "tpu.trace_stop"() : () -> ()
    %84 = vector.shape_cast %83 : vector<2x16x16xf32> to vector<32x16xf32>
    %85 = arith.truncf %84 : vector<32x16xf32> to vector<32x16xbf16>
    %86 = vector.extract_strided_slice %7 {offsets = [16, 0], sizes = [16, 64], strides = [1, 1]} : vector<64x64xbf16> to vector<16x64xbf16>
    %cst_42 = arith.constant dense<0.000000e+00> : vector<32x64xf32>
    %87 = tpu.matmul %85, %86, %cst_42 {dimension_numbers = #tpu.dot_dimension_numbers<[1], [0], [0], [1], [0, 0, 1, 1], [], []>} : vector<32x16xbf16>, vector<16x64xbf16>, vector<32x64xf32> -> vector<32x64xf32>
    %88 = arith.addf %66, %87 : vector<32x64xf32>
    %89 = vector.extract_strided_slice %43 {offsets = [0, 0, 32], sizes = [2, 16, 16], strides = [1, 1, 1]} : vector<2x16x192xf32> to vector<2x16x16xf32>
    %90 = vector.extract_strided_slice %43 {offsets = [0, 0, 96], sizes = [2, 16, 16], strides = [1, 1, 1]} : vector<2x16x192xf32> to vector<2x16x16xf32>
    %91 = vector.extract_strided_slice %43 {offsets = [0, 0, 160], sizes = [2, 16, 16], strides = [1, 1, 1]} : vector<2x16x192xf32> to vector<2x16x16xf32>
    "tpu.trace_start"() <{level = 10 : i32, message = "bqd,bkd->bqk"}> : () -> ()
    %cst_43 = arith.constant dense<0.000000e+00> : vector<2x16x16xf32>
    %92 = tpu.matmul %89, %90, %cst_43 {dimension_numbers = #tpu.dot_dimension_numbers<[2], [2], [1], [1], [0, 0, 0, 1, 1, 1], [0], [0]>} : vector<2x16x16xf32>, vector<2x16x16xf32>, vector<2x16x16xf32> -> vector<2x16x16xf32>
    "tpu.trace_stop"() : () -> ()
    %cst_44 = arith.constant 2.500000e-01 : f32
    %93 = vector.broadcast %cst_44 : f32 to vector<2x16x16xf32>
    %94 = arith.mulf %92, %93 : vector<2x16x16xf32>
    %cst_45 = arith.constant dense<0xFF800000> : vector<2x16xf32>
    %95 = vector.multi_reduction <maximumf>, %94, %cst_45 [2] : vector<2x16x16xf32> to vector<2x16xf32>
    %96 = vector.shape_cast %95 : vector<2x16xf32> to vector<2x16x1xf32>
    %97 = vector.broadcast %96 : vector<2x16x1xf32> to vector<2x16x16xf32>
    %98 = arith.subf %94, %97 : vector<2x16x16xf32>
    %99 = math.exp %98 : vector<2x16x16xf32>
    %cst_46 = arith.constant dense<0.000000e+00> : vector<2x16xf32>
    %100 = vector.multi_reduction <add>, %99, %cst_46 [2] : vector<2x16x16xf32> to vector<2x16xf32>
    %101 = vector.shape_cast %100 : vector<2x16xf32> to vector<2x16x1xf32>
    %102 = tpu.reciprocal %101 {approx = true} : vector<2x16x1xf32> -> vector<2x16x1xf32>
    %103 = vector.broadcast %102 : vector<2x16x1xf32> to vector<2x16x16xf32>
    %104 = arith.mulf %99, %103 : vector<2x16x16xf32>
    "tpu.trace_start"() <{level = 10 : i32, message = "bqk,bkd->bqd"}> : () -> ()
    %cst_47 = arith.constant dense<0.000000e+00> : vector<2x16x16xf32>
    %105 = tpu.matmul %104, %91, %cst_47 {dimension_numbers = #tpu.dot_dimension_numbers<[2], [1], [1], [2], [0, 0, 0, 1, 1, 2], [0], [0]>} : vector<2x16x16xf32>, vector<2x16x16xf32>, vector<2x16x16xf32> -> vector<2x16x16xf32>
    "tpu.trace_stop"() : () -> ()
    %106 = vector.shape_cast %105 : vector<2x16x16xf32> to vector<32x16xf32>
    %107 = arith.truncf %106 : vector<32x16xf32> to vector<32x16xbf16>
    %108 = vector.extract_strided_slice %7 {offsets = [32, 0], sizes = [16, 64], strides = [1, 1]} : vector<64x64xbf16> to vector<16x64xbf16>
    %cst_48 = arith.constant dense<0.000000e+00> : vector<32x64xf32>
    %109 = tpu.matmul %107, %108, %cst_48 {dimension_numbers = #tpu.dot_dimension_numbers<[1], [0], [0], [1], [0, 0, 1, 1], [], []>} : vector<32x16xbf16>, vector<16x64xbf16>, vector<32x64xf32> -> vector<32x64xf32>
    %110 = arith.addf %88, %109 : vector<32x64xf32>
    %111 = vector.extract_strided_slice %43 {offsets = [0, 0, 48], sizes = [2, 16, 16], strides = [1, 1, 1]} : vector<2x16x192xf32> to vector<2x16x16xf32>
    %112 = vector.extract_strided_slice %43 {offsets = [0, 0, 112], sizes = [2, 16, 16], strides = [1, 1, 1]} : vector<2x16x192xf32> to vector<2x16x16xf32>
    %113 = vector.extract_strided_slice %43 {offsets = [0, 0, 176], sizes = [2, 16, 16], strides = [1, 1, 1]} : vector<2x16x192xf32> to vector<2x16x16xf32>
    "tpu.trace_start"() <{level = 10 : i32, message = "bqd,bkd->bqk"}> : () -> ()
    %cst_49 = arith.constant dense<0.000000e+00> : vector<2x16x16xf32>
    %114 = tpu.matmul %111, %112, %cst_49 {dimension_numbers = #tpu.dot_dimension_numbers<[2], [2], [1], [1], [0, 0, 0, 1, 1, 1], [0], [0]>} : vector<2x16x16xf32>, vector<2x16x16xf32>, vector<2x16x16xf32> -> vector<2x16x16xf32>
    "tpu.trace_stop"() : () -> ()
    %cst_50 = arith.constant 2.500000e-01 : f32
    %115 = vector.broadcast %cst_50 : f32 to vector<2x16x16xf32>
    %116 = arith.mulf %114, %115 : vector<2x16x16xf32>
    %cst_51 = arith.constant dense<0xFF800000> : vector<2x16xf32>
    %117 = vector.multi_reduction <maximumf>, %116, %cst_51 [2] : vector<2x16x16xf32> to vector<2x16xf32>
    %118 = vector.shape_cast %117 : vector<2x16xf32> to vector<2x16x1xf32>
    %119 = vector.broadcast %118 : vector<2x16x1xf32> to vector<2x16x16xf32>
    %120 = arith.subf %116, %119 : vector<2x16x16xf32>
    %121 = math.exp %120 : vector<2x16x16xf32>
    %cst_52 = arith.constant dense<0.000000e+00> : vector<2x16xf32>
    %122 = vector.multi_reduction <add>, %121, %cst_52 [2] : vector<2x16x16xf32> to vector<2x16xf32>
    %123 = vector.shape_cast %122 : vector<2x16xf32> to vector<2x16x1xf32>
    %124 = tpu.reciprocal %123 {approx = true} : vector<2x16x1xf32> -> vector<2x16x1xf32>
    %125 = vector.broadcast %124 : vector<2x16x1xf32> to vector<2x16x16xf32>
    %126 = arith.mulf %121, %125 : vector<2x16x16xf32>
    "tpu.trace_start"() <{level = 10 : i32, message = "bqk,bkd->bqd"}> : () -> ()
    %cst_53 = arith.constant dense<0.000000e+00> : vector<2x16x16xf32>
    %127 = tpu.matmul %126, %113, %cst_53 {dimension_numbers = #tpu.dot_dimension_numbers<[2], [1], [1], [2], [0, 0, 0, 1, 1, 2], [0], [0]>} : vector<2x16x16xf32>, vector<2x16x16xf32>, vector<2x16x16xf32> -> vector<2x16x16xf32>
    "tpu.trace_stop"() : () -> ()
    %128 = vector.shape_cast %127 : vector<2x16x16xf32> to vector<32x16xf32>
    %129 = arith.truncf %128 : vector<32x16xf32> to vector<32x16xbf16>
    %130 = vector.extract_strided_slice %7 {offsets = [48, 0], sizes = [16, 64], strides = [1, 1]} : vector<64x64xbf16> to vector<16x64xbf16>
    %cst_54 = arith.constant dense<0.000000e+00> : vector<32x64xf32>
    %131 = tpu.matmul %129, %130, %cst_54 {dimension_numbers = #tpu.dot_dimension_numbers<[1], [0], [0], [1], [0, 0, 1, 1], [], []>} : vector<32x16xbf16>, vector<16x64xbf16>, vector<32x64xf32> -> vector<32x64xf32>
    %132 = arith.addf %110, %131 : vector<32x64xf32>
    %133 = arith.addf %0, %132 : vector<32x64xf32>
    %134 = vector.broadcast %8 : vector<1x64xf32> to vector<32x64xf32>
    %135 = arith.addf %133, %134 : vector<32x64xf32>
    %136 = arith.truncf %135 : vector<32x64xf32> to vector<32x64xbf16>
    %cst_55 = arith.constant dense<0.000000e+00> : vector<32x128xf32>
    %137 = tpu.matmul %136, %9, %cst_55 {dimension_numbers = #tpu.dot_dimension_numbers<[1], [0], [0], [1], [0, 0, 1, 1], [], []>} : vector<32x64xbf16>, vector<64x128xbf16>, vector<32x128xf32> -> vector<32x128xf32>
    %138 = arith.addf %137, %13 : vector<32x128xf32>
    %139 = arith.mulf %138, %138 : vector<32x128xf32>
    %140 = arith.mulf %138, %139 : vector<32x128xf32>
    %cst_56 = arith.constant 4.471500e-02 : f32
    %141 = vector.broadcast %cst_56 : f32 to vector<32x128xf32>
    %142 = arith.mulf %141, %140 : vector<32x128xf32>
    %143 = arith.addf %138, %142 : vector<32x128xf32>
    %cst_57 = arith.constant 0.797884583 : f32
    %144 = vector.broadcast %cst_57 : f32 to vector<32x128xf32>
    %145 = arith.mulf %144, %143 : vector<32x128xf32>
    %146 = math.tanh %145 : vector<32x128xf32>
    %cst_58 = arith.constant 1.000000e+00 : f32
    %147 = vector.broadcast %cst_58 : f32 to vector<32x128xf32>
    %148 = arith.addf %147, %146 : vector<32x128xf32>
    %cst_59 = arith.constant 5.000000e-01 : f32
    %149 = vector.broadcast %cst_59 : f32 to vector<32x128xf32>
    %150 = arith.mulf %149, %148 : vector<32x128xf32>
    %151 = arith.mulf %138, %150 : vector<32x128xf32>
    %152 = arith.truncf %151 : vector<32x128xf32> to vector<32x128xbf16>
    %cst_60 = arith.constant dense<0.000000e+00> : vector<32x64xf32>
    %153 = tpu.matmul %152, %10, %cst_60 {dimension_numbers = #tpu.dot_dimension_numbers<[1], [0], [0], [1], [0, 0, 1, 1], [], []>} : vector<32x128xbf16>, vector<128x64xbf16>, vector<32x64xf32> -> vector<32x64xf32>
    %154 = arith.addf %153, %16 : vector<32x64xf32>
    %cst_61 = arith.constant dense<0.000000e+00> : vector<32xf32>
    %155 = vector.multi_reduction <add>, %154, %cst_61 [1] : vector<32x64xf32> to vector<32xf32>
    %156 = vector.shape_cast %155 : vector<32xf32> to vector<32x1xf32>
    %cst_62 = arith.constant 6.400000e+01 : f32
    %157 = vector.broadcast %cst_62 : f32 to vector<32x1xf32>
    %158 = arith.divf %156, %157 : vector<32x1xf32>
    %159 = vector.broadcast %158 : vector<32x1xf32> to vector<32x64xf32>
    %160 = arith.subf %154, %159 : vector<32x64xf32>
    %161 = arith.mulf %160, %160 : vector<32x64xf32>
    %cst_63 = arith.constant dense<0.000000e+00> : vector<32xf32>
    %162 = vector.multi_reduction <add>, %161, %cst_63 [1] : vector<32x64xf32> to vector<32xf32>
    %163 = vector.shape_cast %162 : vector<32xf32> to vector<32x1xf32>
    %cst_64 = arith.constant 6.400000e+01 : f32
    %164 = vector.broadcast %cst_64 : f32 to vector<32x1xf32>
    %165 = arith.divf %163, %164 : vector<32x1xf32>
    %166 = vector.broadcast %158 : vector<32x1xf32> to vector<32x64xf32>
    %167 = arith.subf %154, %166 : vector<32x64xf32>
    %cst_65 = arith.constant 9.99999997E-7 : f32
    %168 = vector.broadcast %cst_65 : f32 to vector<32x1xf32>
    %169 = arith.addf %165, %168 : vector<32x1xf32>
    %170 = math.rsqrt %169 : vector<32x1xf32>
    %171 = vector.broadcast %170 : vector<32x1xf32> to vector<32x64xf32>
    %172 = arith.mulf %167, %171 : vector<32x64xf32>
    %173 = vector.broadcast %3 : vector<1x64xf32> to vector<32x64xf32>
    %174 = arith.mulf %172, %173 : vector<32x64xf32>
    %175 = vector.broadcast %4 : vector<1x64xf32> to vector<32x64xf32>
    %176 = arith.addf %174, %175 : vector<32x64xf32>
    %177 = arith.truncf %176 : vector<32x64xf32> to vector<32x64xbf16>
    %cst_66 = arith.constant dense<0.000000e+00> : vector<32x128xf32>
    %178 = tpu.matmul %177, %9, %cst_66 {dimension_numbers = #tpu.dot_dimension_numbers<[1], [0], [0], [1], [0, 0, 1, 1], [], []>} : vector<32x64xbf16>, vector<64x128xbf16>, vector<32x128xf32> -> vector<32x128xf32>
    %179 = arith.addf %178, %13 : vector<32x128xf32>
    %180 = arith.mulf %179, %179 : vector<32x128xf32>
    %181 = arith.mulf %179, %180 : vector<32x128xf32>
    %cst_67 = arith.constant 4.471500e-02 : f32
    %182 = vector.broadcast %cst_67 : f32 to vector<32x128xf32>
    %183 = arith.mulf %182, %181 : vector<32x128xf32>
    %184 = arith.addf %179, %183 : vector<32x128xf32>
    %cst_68 = arith.constant 0.797884583 : f32
    %185 = vector.broadcast %cst_68 : f32 to vector<32x128xf32>
    %186 = arith.mulf %185, %184 : vector<32x128xf32>
    %187 = math.tanh %186 : vector<32x128xf32>
    %cst_69 = arith.constant 1.000000e+00 : f32
    %188 = vector.broadcast %cst_69 : f32 to vector<32x128xf32>
    %189 = arith.addf %188, %187 : vector<32x128xf32>
    %cst_70 = arith.constant 5.000000e-01 : f32
    %190 = vector.broadcast %cst_70 : f32 to vector<32x128xf32>
    %191 = arith.mulf %190, %189 : vector<32x128xf32>
    %192 = arith.mulf %179, %191 : vector<32x128xf32>
    %193 = arith.truncf %192 : vector<32x128xf32> to vector<32x128xbf16>
    %cst_71 = arith.constant dense<0.000000e+00> : vector<32x64xf32>
    %194 = tpu.matmul %193, %10, %cst_71 {dimension_numbers = #tpu.dot_dimension_numbers<[1], [0], [0], [1], [0, 0, 1, 1], [], []>} : vector<32x128xbf16>, vector<128x64xbf16>, vector<32x64xf32> -> vector<32x64xf32>
    %195 = arith.addf %194, %16 : vector<32x64xf32>
    %196 = arith.addf %135, %195 : vector<32x64xf32>
    %c0_72 = arith.constant 0 : index
    %c0_73 = arith.constant 0 : index
    %197 = vector.load %arg13[%c0_72, %c0_73] : memref<32x64xf32, #tpu.memory_space<vmem>>, vector<32x64xf32>
    tpu.vector_store %arg13[%c0_72, %c0_73], %196 {strides = array<i32>} : memref<32x64xf32, #tpu.memory_space<vmem>>, vector<32x64xf32>,
    return
  }
}

</mosaic_0001>

<llo_original>
// kernel: siglip_encoder_layer.1
$region0: #{siglip_encoder_layer.1}
  #allocation0 [shape = 'u32[]', space=smem, size = 0x4, offset = 0x4, fixed_abs, tag = 'smem constant byte address 0x4 - core index']
  #allocation1 [shape = 'u32[144,128]{1,0:T(1,128)}', space=vmem, size = 0x12000, scoped, tag = 'internal scratch']
  %s0 = inlined_call_operand.vmem [shape: f32[32,64], index: 0, kind: input, shape index: {}]
  %s1 = inlined_call_operand.vmem [shape: f32[1,64], index: 1, kind: input, shape index: {}]
  %s2 = inlined_call_operand.vmem [shape: f32[1,64], index: 2, kind: input, shape index: {}]
  %s3 = inlined_call_operand.vmem [shape: bf16[64,192], index: 3, kind: input, shape index: {}]
  %s4 = inlined_call_operand.vmem [shape: f32[1,192], index: 4, kind: input, shape index: {}]
  %s5 = inlined_call_operand.vmem [shape: bf16[64,64], index: 5, kind: input, shape index: {}]
  %s6 = inlined_call_operand.vmem [shape: f32[1,64], index: 6, kind: input, shape index: {}]
  %s7 = inlined_call_operand.vmem [shape: f32[1,64], index: 7, kind: input, shape index: {}]
  %s8 = inlined_call_operand.vmem [shape: f32[1,64], index: 8, kind: input, shape index: {}]
  %s9 = inlined_call_operand.vmem [shape: bf16[64,128], index: 9, kind: input, shape index: {}]
  %s10 = inlined_call_operand.vmem [shape: f32[1,128], index: 10, kind: input, shape index: {}]
  %s11 = inlined_call_operand.vmem [shape: bf16[128,64], index: 11, kind: input, shape index: {}]
  %s12 = inlined_call_operand.vmem [shape: f32[1,64], index: 12, kind: input, shape index: {}]
  %s13 = inlined_call_operand.hbm [shape: f32[32,64], index: 13, kind: output, shape index: {}]
  %s14 = sld [smem:[#allocation0]]
  $region62: #{siglip_encoder_layer.1} parent=0
    _
  %s16 = ssub.s32 1, %s14
  %s17 = scalar_select 0, %s16, %s14
  $region1: #{siglip_encoder_layer.1} parent=0
    #allocation2 [shape = 'u8[16384]{0}', space=vmem, size = 0x4000, scoped, tag = 'output window, operand 0, single buffered']
    #allocation3 [shape = 's32[1]{0}', space=sflag, size = 0x4, scoped, tag = 'scoped memory for siglip_encoder_layer.1']
    %18 = vsyncpa [#allocation3], 0
    // Predicated region
    $region2: #{siglip_encoder_layer.1} parent=1 // pred_check
      _
    $region3: #{siglip_encoder_layer.1} parent=1 // pred_check_branch
      %20 = sbr.rel (0) target = $region5
    $region4: #{siglip_encoder_layer.1} parent=1 // pred_region
      _
    $region5: #{siglip_encoder_layer.1} parent=1 // pred_fallthru
      _
    // Predicated region
    $region6: #{siglip_encoder_layer.1} parent=1 // pred_check
      _
    $region7: #{siglip_encoder_layer.1} parent=1 // pred_check_branch
      %22 = sbr.rel (0) target = $region9
    $region8: #{siglip_encoder_layer.1} parent=1 // pred_region
      _
    $region9: #{siglip_encoder_layer.1} parent=1 // pred_fallthru
      _
    // Predicated region
    $region10: #{siglip_encoder_layer.1} parent=1 // pred_check
      _
    $region11: #{siglip_encoder_layer.1} parent=1 // pred_check_branch
      %24 = sbr.rel (0) target = $region13
    $region12: #{siglip_encoder_layer.1} parent=1 // pred_region
      _
    $region13: #{siglip_encoder_layer.1} parent=1 // pred_fallthru
      _
    // Predicated region
    $region14: #{siglip_encoder_layer.1} parent=1 // pred_check
      _
    $region15: #{siglip_encoder_layer.1} parent=1 // pred_check_branch
      %26 = sbr.rel (0) target = $region17
    $region16: #{siglip_encoder_layer.1} parent=1 // pred_region
      _
    $region17: #{siglip_encoder_layer.1} parent=1 // pred_fallthru
      _
    // Predicated region
    $region18: #{siglip_encoder_layer.1} parent=1 // pred_check
      _
    $region19: #{siglip_encoder_layer.1} parent=1 // pred_check_branch
      %28 = sbr.rel (0) target = $region21
    $region20: #{siglip_encoder_layer.1} parent=1 // pred_region
      _
    $region21: #{siglip_encoder_layer.1} parent=1 // pred_fallthru
      _
    // Predicated region
    $region22: #{siglip_encoder_layer.1} parent=1 // pred_check
      _
    $region23: #{siglip_encoder_layer.1} parent=1 // pred_check_branch
      %30 = sbr.rel (0) target = $region25
    $region24: #{siglip_encoder_layer.1} parent=1 // pred_region
      _
    $region25: #{siglip_encoder_layer.1} parent=1 // pred_fallthru
      _
    // Predicated region
    $region26: #{siglip_encoder_layer.1} parent=1 // pred_check
      _
    $region27: #{siglip_encoder_layer.1} parent=1 // pred_check_branch
      %32 = sbr.rel (0) target = $region29
    $region28: #{siglip_encoder_layer.1} parent=1 // pred_region
      _
    $region29: #{siglip_encoder_layer.1} parent=1 // pred_fallthru
      _
    // Predicated region
    $region30: #{siglip_encoder_layer.1} parent=1 // pred_check
      _
    $region31: #{siglip_encoder_layer.1} parent=1 // pred_check_branch
      %34 = sbr.rel (0) target = $region33
    $region32: #{siglip_encoder_layer.1} parent=1 // pred_region
      _
    $region33: #{siglip_encoder_layer.1} parent=1 // pred_fallthru
      _
    // Predicated region
    $region34: #{siglip_encoder_layer.1} parent=1 // pred_check
      _
    $region35: #{siglip_encoder_layer.1} parent=1 // pred_check_branch
      %36 = sbr.rel (0) target = $region37
    $region36: #{siglip_encoder_layer.1} parent=1 // pred_region
      _
    $region37: #{siglip_encoder_layer.1} parent=1 // pred_fallthru
      _
    // Predicated region
    $region38: #{siglip_encoder_layer.1} parent=1 // pred_check
      _
    $region39: #{siglip_encoder_layer.1} parent=1 // pred_check_branch
      %38 = sbr.rel (0) target = $region41
    $region40: #{siglip_encoder_layer.1} parent=1 // pred_region
      _
    $region41: #{siglip_encoder_layer.1} parent=1 // pred_fallthru
      _
    // Predicated region
    $region42: #{siglip_encoder_layer.1} parent=1 // pred_check
      _
    $region43: #{siglip_encoder_layer.1} parent=1 // pred_check_branch
      %40 = sbr.rel (0) target = $region45
    $region44: #{siglip_encoder_layer.1} parent=1 // pred_region
      _
    $region45: #{siglip_encoder_layer.1} parent=1 // pred_fallthru
      _
    // Predicated region
    $region46: #{siglip_encoder_layer.1} parent=1 // pred_check
      _
    $region47: #{siglip_encoder_layer.1} parent=1 // pred_check_branch
      %42 = sbr.rel (0) target = $region49
    $region48: #{siglip_encoder_layer.1} parent=1 // pred_region
      _
    $region49: #{siglip_encoder_layer.1} parent=1 // pred_fallthru
      _
    // Predicated region
    $region50: #{siglip_encoder_layer.1} parent=1 // pred_check
      _
    $region51: #{siglip_encoder_layer.1} parent=1 // pred_check_branch
      %44 = sbr.rel (0) target = $region53
    $region52: #{siglip_encoder_layer.1} parent=1 // pred_region
      _
    $region53: #{siglip_encoder_layer.1} parent=1 // pred_fallthru
      _
    %v46 = vld [vmem:[%s0] sm:$0xff]
    %v47 = vld [vmem:[%s0 + $0x8] sm:$0xff]
    %v48 = vld [vmem:[%s0 + $0x10] sm:$0xff]
    %v49 = vld [vmem:[%s0 + $0x18] sm:$0xff]
    %v50 = vld [vmem:[%s1] sm:$0x1]
    %v51 = vld [vmem:[%s2] sm:$0x1]
    %v52 = vld [vmem:[%s7] sm:$0x1]
    %v53 = vld [vmem:[%s8] sm:$0x1]
    %v54 = vld [vmem:[%s3] sm:$0xff]
    %v55 = vld [vmem:[%s3 + $0x8] sm:$0xff]
    %v56 = vld [vmem:[%s3 + $0x10] sm:$0xff]
    %v57 = vld [vmem:[%s3 + $0x18] sm:$0xff]
    %v58 = vld [vmem:[%s3 + $0x20] sm:$0xff]
    %v59 = vld [vmem:[%s3 + $0x28] sm:$0xff]
    %v60 = vld [vmem:[%s3 + $0x30] sm:$0xff]
    %v61 = vld [vmem:[%s3 + $0x38] sm:$0xff]
    %v62 = vld [vmem:[%s4] sm:$0x3]
    %v63 = vld [vmem:[%s5] sm:$0xf]
    %v64 = vld [vmem:[%s5 + $0x4] sm:$0xf]
    %v65 = vld [vmem:[%s5 + $0x8] sm:$0xf]
    %v66 = vld [vmem:[%s5 + $0xc] sm:$0xf]
    %v67 = vld [vmem:[%s5 + $0x10] sm:$0xf]
    %v68 = vld [vmem:[%s5 + $0x14] sm:$0xf]
    %v69 = vld [vmem:[%s5 + $0x18] sm:$0xf]
    %v70 = vld [vmem:[%s5 + $0x1c] sm:$0xf]
    %v71 = vld [vmem:[%s6] sm:$0x1]
    %v72 = vld [vmem:[%s9] sm:$0xf]
    %v73 = vld [vmem:[%s9 + $0x4] sm:$0xf]
    %v74 = vld [vmem:[%s9 + $0x8] sm:$0xf]
    %v75 = vld [vmem:[%s9 + $0xc] sm:$0xf]
    %v76 = vld [vmem:[%s9 + $0x10] sm:$0xf]
    %v77 = vld [vmem:[%s9 + $0x14] sm:$0xf]
    %v78 = vld [vmem:[%s9 + $0x18] sm:$0xf]
    %v79 = vld [vmem:[%s9 + $0x1c] sm:$0xf]
    %v80 = vld [vmem:[%s11] sm:$0xf]
    %v81 = vld [vmem:[%s11 + $0x4] sm:$0xf]
    %v82 = vld [vmem:[%s11 + $0x8] sm:$0xf]
    %v83 = vld [vmem:[%s11 + $0xc] sm:$0xf]
    %v84 = vld [vmem:[%s11 + $0x10] sm:$0xf]
    %v85 = vld [vmem:[%s11 + $0x14] sm:$0xf]
    %v86 = vld [vmem:[%s11 + $0x18] sm:$0xf]
    %v87 = vld [vmem:[%s11 + $0x1c] sm:$0xf]
    %v88 = vld [vmem:[%s11 + $0x20] sm:$0xf]
    %v89 = vld [vmem:[%s11 + $0x24] sm:$0xf]
    %v90 = vld [vmem:[%s11 + $0x28] sm:$0xf]
    %v91 = vld [vmem:[%s11 + $0x2c] sm:$0xf]
    %v92 = vld [vmem:[%s11 + $0x30] sm:$0xf]
    %v93 = vld [vmem:[%s11 + $0x34] sm:$0xf]
    %v94 = vld [vmem:[%s11 + $0x38] sm:$0xf]
    %v95 = vld [vmem:[%s11 + $0x3c] sm:$0xf]
    %v96 = vld [vmem:[%s10] sm:$0x1]
    %v98 = vlaneseq
    %v99 = vshrl.u32 %v98, 7
    %v100 = vsub.s32 0, %v99
    %v101 = vrot.slane %v96, %v100
    %v103 = vld [vmem:[%s12] sm:$0x1]
    %v105 = vlaneseq
    %v106 = vshrl.u32 %v105, 7
    %v107 = vsub.s32 0, %v106
    %v108 = vrot.slane %v103, %v107
    %vm110 = vcmask 523264
    %v111 = vsel %vm110, %v46, 0.0
    %112 = vadd.xlane.f32.xlu0 %v111
    %v113 = vpop.xlane.xlu0 %112
    %v114 = vsel %vm110, %v47, 0.0
    %115 = vadd.xlane.f32.xlu0 %v114
    %v116 = vpop.xlane.xlu0 %115
    %v117 = vsel %vm110, %v48, 0.0
    %118 = vadd.xlane.f32.xlu0 %v117
    %v119 = vpop.xlane.xlu0 %118
    %v120 = vsel %vm110, %v49, 0.0
    %121 = vadd.xlane.f32.xlu0 %v120
    %v122 = vpop.xlane.xlu0 %121
    %v123 = vrcp.pop 64.0
    %v124 = vmul.f32 %v113, %v123
    %v125 = vmul.f32 %v116, %v123
    %v126 = vmul.f32 %v119, %v123
    %v127 = vmul.f32 %v122, %v123
    %v128 = vsub.f32 %v46, %v124
    %v129 = vsub.f32 %v47, %v125
    %v130 = vsub.f32 %v48, %v126
    %v131 = vsub.f32 %v49, %v127
    %v132 = vmul.f32 %v128, %v128
    %v133 = vmul.f32 %v129, %v129
    %v134 = vmul.f32 %v130, %v130
    %v135 = vmul.f32 %v131, %v131
    %v136 = vsel %vm110, %v132, 0.0
    %137 = vadd.xlane.f32.xlu0 %v136
    %v138 = vpop.xlane.xlu0 %137
    %v139 = vsel %vm110, %v133, 0.0
    %140 = vadd.xlane.f32.xlu0 %v139
    %v141 = vpop.xlane.xlu0 %140
    %v142 = vsel %vm110, %v134, 0.0
    %143 = vadd.xlane.f32.xlu0 %v142
    %v144 = vpop.xlane.xlu0 %143
    %v145 = vsel %vm110, %v135, 0.0
    %146 = vadd.xlane.f32.xlu0 %v145
    %v147 = vpop.xlane.xlu0 %146
    %v148 = vmul.f32 %v138, %v123
    %v149 = vmul.f32 %v141, %v123
    %v150 = vmul.f32 %v144, %v123
    %v151 = vmul.f32 %v147, %v123
    %v152 = vadd.f32 %v148, 1e-06
    %v153 = vadd.f32 %v149, 1e-06
    %v154 = vadd.f32 %v150, 1e-06
    %v155 = vadd.f32 %v151, 1e-06
    %v156 = vrsqrt.pop %v152
    %v157 = vrsqrt.pop %v153
    %v158 = vrsqrt.pop %v154
    %v159 = vrsqrt.pop %v155
    %v160 = vmul.f32 %v128, %v156
    %v161 = vmul.f32 %v129, %v157
    %v162 = vmul.f32 %v130, %v158
    %v163 = vmul.f32 %v131, %v159
    %v165 = vlaneseq
    %v166 = vshrl.u32 %v165, 7
    %v167 = vsub.s32 0, %v166
    %v168 = vrot.slane %v50, %v167
    %v170 = vmul.f32 %v160, %v168
    %v171 = vmul.f32 %v161, %v168
    %v172 = vmul.f32 %v162, %v168
    %v173 = vmul.f32 %v163, %v168
    %v175 = vlaneseq
    %v176 = vshrl.u32 %v175, 7
    %v177 = vsub.s32 0, %v176
    %v178 = vrot.slane %v51, %v177
    %v180 = vadd.f32 %v170, %v178
    %v181 = vadd.f32 %v171, %v178
    %v182 = vadd.f32 %v172, %v178
    %v183 = vadd.f32 %v173, %v178
    %v184 = vpack.c.bf16 %v181, %v180
    %v185 = vpack.c.bf16 %v183, %v182
    %v187 = vlaneseq
    %v188 = vshrl.u32 %v187, 7
    %v189 = vsub.s32 0, %v188
    %v190 = vrot.slane %v62, %v189
    %v191 = vlaneseq
    %v192 = vshrl.u32 %v191, 7
    %v193 = vsub.s32 1, %v192
    %v194 = vrot.slane %v62, %v193
    %v205 = vunpack.c.l.b16 %v54
    %v206 = vunpack.c.h.b16 %v54
    %v207 = vunpack.c.l.b16 %v55
    %v208 = vunpack.c.h.b16 %v55
    %v209 = vunpack.c.l.b16 %v56
    %v210 = vunpack.c.h.b16 %v56
    %v211 = vunpack.c.l.b16 %v57
    %v212 = vunpack.c.h.b16 %v57
    %v213 = vunpack.c.l.b16 %v58
    %v214 = vunpack.c.h.b16 %v58
    %v215 = vunpack.c.l.b16 %v59
    %v216 = vunpack.c.h.b16 %v59
    %v217 = vunpack.c.l.b16 %v60
    %v218 = vunpack.c.h.b16 %v60
    %v219 = vunpack.c.l.b16 %v61
    %v220 = vunpack.c.h.b16 %v61
    %v221 = vpack.c.b16 %v207, %v205
    %v222 = vpack.c.b16 %v208, %v206
    %v223 = vpack.c.b16 %v211, %v209
    %v224 = vpack.c.b16 %v212, %v210
    %v225 = vpack.c.b16 %v215, %v213
    %v226 = vpack.c.b16 %v216, %v214
    %v227 = vpack.c.b16 %v219, %v217
    %v228 = vpack.c.b16 %v220, %v218
    %v238 = vsel %vm110, %v184, 0
    %v241 = vsel %vm110, %v185, 0
    %243 = vmatprep.subr.bf16.mxu0 0
    %244 = vmatpush1.bf16.msra.mxu0 0
    %245 = vmatprep.subr.bf16.mxu0 0
    %246 = vmatpush1.bf16.msra.mxu0 0
    %247 = vmatprep.subr.bf16.mxu0 0
    %248 = vmatpush1.bf16.msra.mxu0 0
    %249 = vmatprep.subr.bf16.mxu0 0
    %250 = vmatpush1.bf16.msra.mxu0 0
    %251 = vmatprep.subr.bf16.mxu0 %v228
    %252 = vmatpush1.bf16.msra.mxu0 %v227
    %253 = vmatprep.subr.bf16.mxu0 %v226
    %254 = vmatpush1.bf16.msra.mxu0 %v225
    %255 = vmatprep.subr.bf16.mxu0 %v224
    %256 = vmatpush1.bf16.msra.mxu0 %v223
    %257 = vmatprep.subr.bf16.mxu0 %v222
    %258 = vmatpush1.bf16.msra.mxu0 %v221
    %259 = vmatprep.subr.bf16.mxu0 0
    %260 = vmatpush2.bf16.msra.mxu0 0
    %261 = vmatprep.subr.bf16.mxu0 0
    %262 = vmatpush2.bf16.msra.mxu0 0
    %263 = vmatprep.subr.bf16.mxu0 0
    %264 = vmatpush2.bf16.msra.mxu0 0
    %265 = vmatprep.subr.bf16.mxu0 0
    %266 = vmatpush2.bf16.msra.mxu0 0
    %267 = vmatprep.subr.bf16.mxu0 0
    %268 = vmatpush2.bf16.msra.mxu0 0
    %269 = vmatprep.subr.bf16.mxu0 0
    %270 = vmatpush2.bf16.msra.mxu0 0
    %271 = vmatprep.subr.bf16.mxu0 0
    %272 = vmatpush2.bf16.msra.mxu0 0
    %273 = vmatprep.subr.bf16.mxu0 0
    %274 = vmatpush2.bf16.msra.mxu0 0
    %275 = vmatprep.mubr.bf16.mxu0 0
    %276 = vmatmul.mubr.bf16.gmra.mxu0 %v238
    %v277 = vpop.f32.mrf.mxu0
    %v278 = vadd.f32 %v190, %v277
    %v279 = vpop.f32.mrf.mxu0
    %v280 = vadd.f32 %v194, %v279
    %v281 = vpop.f32.mrf.mxu0
    %v282 = vadd.f32 %v190, %v281
    %v283 = vpop.f32.mrf.mxu0
    %v284 = vadd.f32 %v194, %v283
    %285 = vmatprep.mubr.bf16.mxu0 0
    %286 = vmatmul.mubr.bf16.gmra.mxu0 %v241
    %v287 = vpop.f32.mrf.mxu0
    %v288 = vadd.f32 %v190, %v287
    %v289 = vpop.f32.mrf.mxu0
    %v290 = vadd.f32 %v194, %v289
    %v291 = vpop.f32.mrf.mxu0
    %v292 = vadd.f32 %v190, %v291
    %v293 = vpop.f32.mrf.mxu0
    %v294 = vadd.f32 %v194, %v293
    %295 = vdwg.mxu0
    %298 = vrot.lane.b32.xlu0 %v278, 64
    %v299 = vpop.permute.xlu0 %298
    %300 = vrot.lane.b32.xlu0 %v282, 64
    %v301 = vpop.permute.xlu0 %300
    %vm302 = vcmask 130048
    %v303 = vsel %vm302, %v278, 0
    %v305 = vsel %vm302, %v282, 0
    %v307 = vsel %vm302, %v299, 0
    %v309 = vsel %vm302, %v301, 0
    %311 = vmatprep.subr.mxu0 0.0
    %312 = vmatpush1.xpose.msra.mxu0 0.0
    %313 = vmatprep.subr.mxu0 0.0
    %314 = vmatpush1.xpose.msra.mxu0 0.0
    %315 = vmatprep.subr.mxu0 0.0
    %316 = vmatpush1.xpose.msra.mxu0 0.0
    %317 = vmatprep.subr.mxu0 0.0
    %318 = vmatpush1.xpose.msra.mxu0 0.0
    %319 = vmatprep.subr.mxu0 0.0
    %320 = vmatpush1.xpose.msra.mxu0 0.0
    %321 = vmatprep.subr.mxu0 0.0
    %322 = vmatpush1.xpose.msra.mxu0 0.0
    %323 = vmatprep.subr.mxu0 0.0
    %324 = vmatpush1.xpose.msra.mxu0 0.0
    %325 = vmatprep.subr.mxu0 0.0
    %326 = vmatpush1.xpose.msra.mxu0 0.0
    %327 = vmatprep.subr.mxu0 0.0
    %328 = vmatpush1.xpose.msra.mxu0 0.0
    %329 = vmatprep.subr.mxu0 0.0
    %330 = vmatpush1.xpose.msra.mxu0 0.0
    %331 = vmatprep.subr.mxu0 0.0
    %332 = vmatpush1.xpose.msra.mxu0 0.0
    %333 = vmatprep.subr.mxu0 0.0
    %334 = vmatpush1.xpose.msra.mxu0 0.0
    %335 = vmatprep.subr.mxu0 0.0
    %336 = vmatpush1.xpose.msra.mxu0 0.0
    %337 = vmatprep.subr.mxu0 0.0
    %338 = vmatpush1.xpose.msra.mxu0 0.0
    %339 = vmatprep.subr.mxu0 0.0
    %340 = vmatpush1.xpose.msra.mxu0 %v309
    %341 = vmatprep.subr.mxu0 0.0
    %342 = vmatpush1.xpose.msra.mxu0 %v307
    %343 = vmatprep.subr.mxu0 0.0
    %344 = vmatpush2.xpose.msra.mxu0 0.0
    %345 = vmatprep.subr.mxu0 0.0
    %346 = vmatpush2.xpose.msra.mxu0 0.0
    %347 = vmatprep.subr.mxu0 0.0
    %348 = vmatpush2.xpose.msra.mxu0 0.0
    %349 = vmatprep.subr.mxu0 0.0
    %350 = vmatpush2.xpose.msra.mxu0 0.0
    %351 = vmatprep.subr.mxu0 0.0
    %352 = vmatpush2.xpose.msra.mxu0 0.0
    %353 = vmatprep.subr.mxu0 0.0
    %354 = vmatpush2.xpose.msra.mxu0 0.0
    %355 = vmatprep.subr.mxu0 0.0
    %356 = vmatpush2.xpose.msra.mxu0 0.0
    %357 = vmatprep.subr.mxu0 0.0
    %358 = vmatpush2.xpose.msra.mxu0 0.0
    %359 = vmatprep.subr.mxu0 0.0
    %360 = vmatpush2.xpose.msra.mxu0 0.0
    %361 = vmatprep.subr.mxu0 0.0
    %362 = vmatpush2.xpose.msra.mxu0 0.0
    %363 = vmatprep.subr.mxu0 0.0
    %364 = vmatpush2.xpose.msra.mxu0 0.0
    %365 = vmatprep.subr.mxu0 0.0
    %366 = vmatpush2.xpose.msra.mxu0 0.0
    %367 = vmatprep.subr.mxu0 0.0
    %368 = vmatpush2.xpose.msra.mxu0 0.0
    %369 = vmatprep.subr.mxu0 0.0
    %370 = vmatpush2.xpose.msra.mxu0 0.0
    %371 = vmatprep.subr.mxu0 0.0
    %372 = vmatpush2.xpose.msra.mxu0 0.0
    %373 = vmatprep.subr.mxu0 0.0
    %374 = vmatpush2.xpose.msra.mxu0 0.0
    %375 = vmatprep.mubr.f32.mxu0 0.0
    %376 = vmatmul.mubr.f32.gmra.mxu0 %v303
    %v377 = vpop.f32.mrf.mxu0
    %v378 = vadd.f32 0.0, %v377
    %v379 = vpop.f32.mrf.mxu0
    %380 = vmatprep.mubr.f32.mxu0 0.0
    %381 = vmatmul.mubr.f32.gmra.mxu0 %v305
    %v382 = vpop.f32.mrf.mxu0
    %v383 = vadd.f32 0.0, %v382
    %v384 = vpop.f32.mrf.mxu0
    %385 = vdwg.mxu0
    %388 = vrot.lane.b32.xlu0 %v288, 64
    %v389 = vpop.permute.xlu0 %388
    %390 = vrot.lane.b32.xlu0 %v292, 64
    %v391 = vpop.permute.xlu0 %390
    %v392 = vsel %vm302, %v288, 0
    %v394 = vsel %vm302, %v292, 0
    %v396 = vsel %vm302, %v389, 0
    %v398 = vsel %vm302, %v391, 0
    %400 = vmatprep.subr.mxu0 0.0
    %401 = vmatpush1.xpose.msra.mxu0 0.0
    %402 = vmatprep.subr.mxu0 0.0
    %403 = vmatpush1.xpose.msra.mxu0 0.0
    %404 = vmatprep.subr.mxu0 0.0
    %405 = vmatpush1.xpose.msra.mxu0 0.0
    %406 = vmatprep.subr.mxu0 0.0
    %407 = vmatpush1.xpose.msra.mxu0 0.0
    %408 = vmatprep.subr.mxu0 0.0
    %409 = vmatpush1.xpose.msra.mxu0 0.0
    %410 = vmatprep.subr.mxu0 0.0
    %411 = vmatpush1.xpose.msra.mxu0 0.0
    %412 = vmatprep.subr.mxu0 0.0
    %413 = vmatpush1.xpose.msra.mxu0 0.0
    %414 = vmatprep.subr.mxu0 0.0
    %415 = vmatpush1.xpose.msra.mxu0 0.0
    %416 = vmatprep.subr.mxu0 0.0
    %417 = vmatpush1.xpose.msra.mxu0 0.0
    %418 = vmatprep.subr.mxu0 0.0
    %419 = vmatpush1.xpose.msra.mxu0 0.0
    %420 = vmatprep.subr.mxu0 0.0
    %421 = vmatpush1.xpose.msra.mxu0 0.0
    %422 = vmatprep.subr.mxu0 0.0
    %423 = vmatpush1.xpose.msra.mxu0 0.0
    %424 = vmatprep.subr.mxu0 0.0
    %425 = vmatpush1.xpose.msra.mxu0 0.0
    %426 = vmatprep.subr.mxu0 0.0
    %427 = vmatpush1.xpose.msra.mxu0 0.0
    %428 = vmatprep.subr.mxu0 0.0
    %429 = vmatpush1.xpose.msra.mxu0 %v398
    %430 = vmatprep.subr.mxu0 0.0
    %431 = vmatpush1.xpose.msra.mxu0 %v396
    %432 = vmatprep.subr.mxu0 0.0
    %433 = vmatpush2.xpose.msra.mxu0 0.0
    %434 = vmatprep.subr.mxu0 0.0
    %435 = vmatpush2.xpose.msra.mxu0 0.0
    %436 = vmatprep.subr.mxu0 0.0
    %437 = vmatpush2.xpose.msra.mxu0 0.0
    %438 = vmatprep.subr.mxu0 0.0
    %439 = vmatpush2.xpose.msra.mxu0 0.0
    %440 = vmatprep.subr.mxu0 0.0
    %441 = vmatpush2.xpose.msra.mxu0 0.0
    %442 = vmatprep.subr.mxu0 0.0
    %443 = vmatpush2.xpose.msra.mxu0 0.0
    %444 = vmatprep.subr.mxu0 0.0
    %445 = vmatpush2.xpose.msra.mxu0 0.0
    %446 = vmatprep.subr.mxu0 0.0
    %447 = vmatpush2.xpose.msra.mxu0 0.0
    %448 = vmatprep.subr.mxu0 0.0
    %449 = vmatpush2.xpose.msra.mxu0 0.0
    %450 = vmatprep.subr.mxu0 0.0
    %451 = vmatpush2.xpose.msra.mxu0 0.0
    %452 = vmatprep.subr.mxu0 0.0
    %453 = vmatpush2.xpose.msra.mxu0 0.0
    %454 = vmatprep.subr.mxu0 0.0
    %455 = vmatpush2.xpose.msra.mxu0 0.0
    %456 = vmatprep.subr.mxu0 0.0
    %457 = vmatpush2.xpose.msra.mxu0 0.0
    %458 = vmatprep.subr.mxu0 0.0
    %459 = vmatpush2.xpose.msra.mxu0 0.0
    %460 = vmatprep.subr.mxu0 0.0
    %461 = vmatpush2.xpose.msra.mxu0 0.0
    %462 = vmatprep.subr.mxu0 0.0
    %463 = vmatpush2.xpose.msra.mxu0 0.0
    %464 = vmatprep.mubr.f32.mxu0 0.0
    %465 = vmatmul.mubr.f32.gmra.mxu0 %v392
    %v466 = vpop.f32.mrf.mxu0
    %v467 = vadd.f32 0.0, %v466
    %v468 = vpop.f32.mrf.mxu0
    %469 = vmatprep.mubr.f32.mxu0 0.0
    %470 = vmatmul.mubr.f32.gmra.mxu0 %v394
    %v471 = vpop.f32.mrf.mxu0
    %v472 = vadd.f32 0.0, %v471
    %v473 = vpop.f32.mrf.mxu0
    %474 = vdwg.mxu0
    %v475 = vmul.f32 %v378, 0.25
    %v476 = vmul.f32 %v383, 0.25
    %v477 = vmul.f32 %v467, 0.25
    %v478 = vmul.f32 %v472, 0.25
    %v479 = vsel %vm302, %v475, -inf
    %480 = vmax.xlane.f32.xlu0 %v479
    %v481 = vpop.xlane.xlu0 %480
    %v482 = vsel %vm302, %v476, -inf
    %483 = vmax.xlane.f32.xlu0 %v482
    %v484 = vpop.xlane.xlu0 %483
    %v485 = vsel %vm302, %v477, -inf
    %486 = vmax.xlane.f32.xlu0 %v485
    %v487 = vpop.xlane.xlu0 %486
    %v488 = vsel %vm302, %v478, -inf
    %489 = vmax.xlane.f32.xlu0 %v488
    %v490 = vpop.xlane.xlu0 %489
    %v491 = vsub.f32 %v475, %v481
    %v492 = vsub.f32 %v476, %v484
    %v493 = vsub.f32 %v477, %v487
    %v494 = vsub.f32 %v478, %v490
    %v495 = vmul.f32 %v491, 1.442695
    %v496 = vpow.pop %v495
    %v497 = vmul.f32 %v492, 1.442695
    %v498 = vpow.pop %v497
    %v499 = vmul.f32 %v493, 1.442695
    %v500 = vpow.pop %v499
    %v501 = vmul.f32 %v494, 1.442695
    %v502 = vpow.pop %v501
    %v503 = vsel %vm302, %v496, 0.0
    %504 = vadd.xlane.f32.xlu0 %v503
    %v505 = vpop.xlane.xlu0 %504
    %v506 = vsel %vm302, %v498, 0.0
    %507 = vadd.xlane.f32.xlu0 %v506
    %v508 = vpop.xlane.xlu0 %507
    %v509 = vsel %vm302, %v500, 0.0
    %510 = vadd.xlane.f32.xlu0 %v509
    %v511 = vpop.xlane.xlu0 %510
    %v512 = vsel %vm302, %v502, 0.0
    %513 = vadd.xlane.f32.xlu0 %v512
    %v514 = vpop.xlane.xlu0 %513
    %v515 = vrcp.pop %v505
    %v516 = vrcp.pop %v508
    %v517 = vrcp.pop %v511
    %v518 = vrcp.pop %v514
    %v519 = vmul.f32 %v496, %v515
    %v520 = vmul.f32 %v498, %v516
    %v521 = vmul.f32 %v500, %v517
    %v522 = vmul.f32 %v502, %v518
    %v524 = vsel %vm302, %v519, 0
    %v527 = vsel %vm302, %v520, 0
    %529 = vmatprep.subr.mxu0 0.0
    %530 = vmatpush1.msra.mxu0 0.0
    %531 = vmatprep.subr.mxu0 0.0
    %532 = vmatpush1.msra.mxu0 0.0
    %533 = vmatprep.subr.mxu0 0.0
    %534 = vmatpush1.msra.mxu0 0.0
    %535 = vmatprep.subr.mxu0 0.0
    %536 = vmatpush1.msra.mxu0 0.0
    %537 = vmatprep.subr.mxu0 0.0
    %538 = vmatpush1.msra.mxu0 0.0
    %539 = vmatprep.subr.mxu0 0.0
    %540 = vmatpush1.msra.mxu0 0.0
    %541 = vmatprep.subr.mxu0 0.0
    %542 = vmatpush1.msra.mxu0 0.0
    %543 = vmatprep.subr.mxu0 0.0
    %544 = vmatpush1.msra.mxu0 0.0
    %545 = vmatprep.subr.mxu0 0.0
    %546 = vmatpush1.msra.mxu0 0.0
    %547 = vmatprep.subr.mxu0 0.0
    %548 = vmatpush1.msra.mxu0 0.0
    %549 = vmatprep.subr.mxu0 0.0
    %550 = vmatpush1.msra.mxu0 0.0
    %551 = vmatprep.subr.mxu0 0.0
    %552 = vmatpush1.msra.mxu0 0.0
    %553 = vmatprep.subr.mxu0 0.0
    %554 = vmatpush1.msra.mxu0 0.0
    %555 = vmatprep.subr.mxu0 0.0
    %556 = vmatpush1.msra.mxu0 0.0
    %557 = vmatprep.subr.mxu0 0.0
    %558 = vmatpush1.msra.mxu0 %v284
    %559 = vmatprep.subr.mxu0 0.0
    %560 = vmatpush1.msra.mxu0 %v280
    %561 = vmatprep.subr.mxu0 0.0
    %562 = vmatpush2.msra.mxu0 0.0
    %563 = vmatprep.subr.mxu0 0.0
    %564 = vmatpush2.msra.mxu0 0.0
    %565 = vmatprep.subr.mxu0 0.0
    %566 = vmatpush2.msra.mxu0 0.0
    %567 = vmatprep.subr.mxu0 0.0
    %568 = vmatpush2.msra.mxu0 0.0
    %569 = vmatprep.subr.mxu0 0.0
    %570 = vmatpush2.msra.mxu0 0.0
    %571 = vmatprep.subr.mxu0 0.0
    %572 = vmatpush2.msra.mxu0 0.0
    %573 = vmatprep.subr.mxu0 0.0
    %574 = vmatpush2.msra.mxu0 0.0
    %575 = vmatprep.subr.mxu0 0.0
    %576 = vmatpush2.msra.mxu0 0.0
    %577 = vmatprep.subr.mxu0 0.0
    %578 = vmatpush2.msra.mxu0 0.0
    %579 = vmatprep.subr.mxu0 0.0
    %580 = vmatpush2.msra.mxu0 0.0
    %581 = vmatprep.subr.mxu0 0.0
    %582 = vmatpush2.msra.mxu0 0.0
    %583 = vmatprep.subr.mxu0 0.0
    %584 = vmatpush2.msra.mxu0 0.0
    %585 = vmatprep.subr.mxu0 0.0
    %586 = vmatpush2.msra.mxu0 0.0
    %587 = vmatprep.subr.mxu0 0.0
    %588 = vmatpush2.msra.mxu0 0.0
    %589 = vmatprep.subr.mxu0 0.0
    %590 = vmatpush2.msra.mxu0 0.0
    %591 = vmatprep.subr.mxu0 0.0
    %592 = vmatpush2.msra.mxu0 0.0
    %593 = vmatprep.mubr.f32.mxu0 0.0
    %594 = vmatmul.mubr.f32.gmra.mxu0 %v524
    %v595 = vpop.f32.mrf.mxu0
    %v596 = vadd.f32 0.0, %v595
    %v597 = vpop.f32.mrf.mxu0
    %598 = vmatprep.mubr.f32.mxu0 0.0
    %599 = vmatmul.mubr.f32.gmra.mxu0 %v527
    %v600 = vpop.f32.mrf.mxu0
    %v601 = vadd.f32 0.0, %v600
    %v602 = vpop.f32.mrf.mxu0
    %603 = vdwg.mxu0
    %v605 = vsel %vm302, %v521, 0
    %v608 = vsel %vm302, %v522, 0
    %610 = vmatprep.subr.mxu0 0.0
    %611 = vmatpush1.msra.mxu0 0.0
    %612 = vmatprep.subr.mxu0 0.0
    %613 = vmatpush1.msra.mxu0 0.0
    %614 = vmatprep.subr.mxu0 0.0
    %615 = vmatpush1.msra.mxu0 0.0
    %616 = vmatprep.subr.mxu0 0.0
    %617 = vmatpush1.msra.mxu0 0.0
    %618 = vmatprep.subr.mxu0 0.0
    %619 = vmatpush1.msra.mxu0 0.0
    %620 = vmatprep.subr.mxu0 0.0
    %621 = vmatpush1.msra.mxu0 0.0
    %622 = vmatprep.subr.mxu0 0.0
    %623 = vmatpush1.msra.mxu0 0.0
    %624 = vmatprep.subr.mxu0 0.0
    %625 = vmatpush1.msra.mxu0 0.0
    %626 = vmatprep.subr.mxu0 0.0
    %627 = vmatpush1.msra.mxu0 0.0
    %628 = vmatprep.subr.mxu0 0.0
    %629 = vmatpush1.msra.mxu0 0.0
    %630 = vmatprep.subr.mxu0 0.0
    %631 = vmatpush1.msra.mxu0 0.0
    %632 = vmatprep.subr.mxu0 0.0
    %633 = vmatpush1.msra.mxu0 0.0
    %634 = vmatprep.subr.mxu0 0.0
    %635 = vmatpush1.msra.mxu0 0.0
    %636 = vmatprep.subr.mxu0 0.0
    %637 = vmatpush1.msra.mxu0 0.0
    %638 = vmatprep.subr.mxu0 0.0
    %639 = vmatpush1.msra.mxu0 %v294
    %640 = vmatprep.subr.mxu0 0.0
    %641 = vmatpush1.msra.mxu0 %v290
    %642 = vmatprep.subr.mxu0 0.0
    %643 = vmatpush2.msra.mxu0 0.0
    %644 = vmatprep.subr.mxu0 0.0
    %645 = vmatpush2.msra.mxu0 0.0
    %646 = vmatprep.subr.mxu0 0.0
    %647 = vmatpush2.msra.mxu0 0.0
    %648 = vmatprep.subr.mxu0 0.0
    %649 = vmatpush2.msra.mxu0 0.0
    %650 = vmatprep.subr.mxu0 0.0
    %651 = vmatpush2.msra.mxu0 0.0
    %652 = vmatprep.subr.mxu0 0.0
    %653 = vmatpush2.msra.mxu0 0.0
    %654 = vmatprep.subr.mxu0 0.0
    %655 = vmatpush2.msra.mxu0 0.0
    %656 = vmatprep.subr.mxu0 0.0
    %657 = vmatpush2.msra.mxu0 0.0
    %658 = vmatprep.subr.mxu0 0.0
    %659 = vmatpush2.msra.mxu0 0.0
    %660 = vmatprep.subr.mxu0 0.0
    %661 = vmatpush2.msra.mxu0 0.0
    %662 = vmatprep.subr.mxu0 0.0
    %663 = vmatpush2.msra.mxu0 0.0
    %664 = vmatprep.subr.mxu0 0.0
    %665 = vmatpush2.msra.mxu0 0.0
    %666 = vmatprep.subr.mxu0 0.0
    %667 = vmatpush2.msra.mxu0 0.0
    %668 = vmatprep.subr.mxu0 0.0
    %669 = vmatpush2.msra.mxu0 0.0
    %670 = vmatprep.subr.mxu0 0.0
    %671 = vmatpush2.msra.mxu0 0.0
    %672 = vmatprep.subr.mxu0 0.0
    %673 = vmatpush2.msra.mxu0 0.0
    %674 = vmatprep.mubr.f32.mxu0 0.0
    %675 = vmatmul.mubr.f32.gmra.mxu0 %v605
    %v676 = vpop.f32.mrf.mxu0
    %v677 = vadd.f32 0.0, %v676
    %v678 = vpop.f32.mrf.mxu0
    %679 = vmatprep.mubr.f32.mxu0 0.0
    %680 = vmatmul.mubr.f32.gmra.mxu0 %v608
    %v681 = vpop.f32.mrf.mxu0
    %v682 = vadd.f32 0.0, %v681
    %v683 = vpop.f32.mrf.mxu0
    %684 = vdwg.mxu0
    %v685 = vpack.c.bf16 %v601, %v596
    %v686 = vpack.c.bf16 %v682, %v677
    %687 = vrot.lane.b32.xlu0 %v278, 112
    %v688 = vpop.permute.xlu0 %687
    %689 = vrot.lane.b32.xlu0 %v282, 112
    %v690 = vpop.permute.xlu0 %689
    %691 = vrot.lane.b32.xlu0 %v278, 48
    %v692 = vpop.permute.xlu0 %691
    %693 = vrot.lane.b32.xlu0 %v282, 48
    %v694 = vpop.permute.xlu0 %693
    %v695 = vsel %vm302, %v688, 0
    %v697 = vsel %vm302, %v690, 0
    %v699 = vsel %vm302, %v692, 0
    %v701 = vsel %vm302, %v694, 0
    %703 = vmatprep.subr.mxu0 0.0
    %704 = vmatpush1.xpose.msra.mxu0 0.0
    %705 = vmatprep.subr.mxu0 0.0
    %706 = vmatpush1.xpose.msra.mxu0 0.0
    %707 = vmatprep.subr.mxu0 0.0
    %708 = vmatpush1.xpose.msra.mxu0 0.0
    %709 = vmatprep.subr.mxu0 0.0
    %710 = vmatpush1.xpose.msra.mxu0 0.0
    %711 = vmatprep.subr.mxu0 0.0
    %712 = vmatpush1.xpose.msra.mxu0 0.0
    %713 = vmatprep.subr.mxu0 0.0
    %714 = vmatpush1.xpose.msra.mxu0 0.0
    %715 = vmatprep.subr.mxu0 0.0
    %716 = vmatpush1.xpose.msra.mxu0 0.0
    %717 = vmatprep.subr.mxu0 0.0
    %718 = vmatpush1.xpose.msra.mxu0 0.0
    %719 = vmatprep.subr.mxu0 0.0
    %720 = vmatpush1.xpose.msra.mxu0 0.0
    %721 = vmatprep.subr.mxu0 0.0
    %722 = vmatpush1.xpose.msra.mxu0 0.0
    %723 = vmatprep.subr.mxu0 0.0
    %724 = vmatpush1.xpose.msra.mxu0 0.0
    %725 = vmatprep.subr.mxu0 0.0
    %726 = vmatpush1.xpose.msra.mxu0 0.0
    %727 = vmatprep.subr.mxu0 0.0
    %728 = vmatpush1.xpose.msra.mxu0 0.0
    %729 = vmatprep.subr.mxu0 0.0
    %730 = vmatpush1.xpose.msra.mxu0 0.0
    %731 = vmatprep.subr.mxu0 0.0
    %732 = vmatpush1.xpose.msra.mxu0 %v701
    %733 = vmatprep.subr.mxu0 0.0
    %734 = vmatpush1.xpose.msra.mxu0 %v699
    %735 = vmatprep.subr.mxu0 0.0
    %736 = vmatpush2.xpose.msra.mxu0 0.0
    %737 = vmatprep.subr.mxu0 0.0
    %738 = vmatpush2.xpose.msra.mxu0 0.0
    %739 = vmatprep.subr.mxu0 0.0
    %740 = vmatpush2.xpose.msra.mxu0 0.0
    %741 = vmatprep.subr.mxu0 0.0
    %742 = vmatpush2.xpose.msra.mxu0 0.0
    %743 = vmatprep.subr.mxu0 0.0
    %744 = vmatpush2.xpose.msra.mxu0 0.0
    %745 = vmatprep.subr.mxu0 0.0
    %746 = vmatpush2.xpose.msra.mxu0 0.0
    %747 = vmatprep.subr.mxu0 0.0
    %748 = vmatpush2.xpose.msra.mxu0 0.0
    %749 = vmatprep.subr.mxu0 0.0
    %750 = vmatpush2.xpose.msra.mxu0 0.0
    %751 = vmatprep.subr.mxu0 0.0
    %752 = vmatpush2.xpose.msra.mxu0 0.0
    %753 = vmatprep.subr.mxu0 0.0
    %754 = vmatpush2.xpose.msra.mxu0 0.0
    %755 = vmatprep.subr.mxu0 0.0
    %756 = vmatpush2.xpose.msra.mxu0 0.0
    %757 = vmatprep.subr.mxu0 0.0
    %758 = vmatpush2.xpose.msra.mxu0 0.0
    %759 = vmatprep.subr.mxu0 0.0
    %760 = vmatpush2.xpose.msra.mxu0 0.0
    %761 = vmatprep.subr.mxu0 0.0
    %762 = vmatpush2.xpose.msra.mxu0 0.0
    %763 = vmatprep.subr.mxu0 0.0
    %764 = vmatpush2.xpose.msra.mxu0 0.0
    %765 = vmatprep.subr.mxu0 0.0
    %766 = vmatpush2.xpose.msra.mxu0 0.0
    %767 = vmatprep.mubr.f32.mxu0 0.0
    %768 = vmatmul.mubr.f32.gmra.mxu0 %v695
    %v769 = vpop.f32.mrf.mxu0
    %v770 = vadd.f32 0.0, %v769
    %v771 = vpop.f32.mrf.mxu0
    %772 = vmatprep.mubr.f32.mxu0 0.0
    %773 = vmatmul.mubr.f32.gmra.mxu0 %v697
    %v774 = vpop.f32.mrf.mxu0
    %v775 = vadd.f32 0.0, %v774
    %v776 = vpop.f32.mrf.mxu0
    %777 = vdwg.mxu0
    %778 = vrot.lane.b32.xlu0 %v288, 112
    %v779 = vpop.permute.xlu0 %778
    %780 = vrot.lane.b32.xlu0 %v292, 112
    %v781 = vpop.permute.xlu0 %780
    %782 = vrot.lane.b32.xlu0 %v288, 48
    %v783 = vpop.permute.xlu0 %782
    %784 = vrot.lane.b32.xlu0 %v292, 48
    %v785 = vpop.permute.xlu0 %784
    %v786 = vsel %vm302, %v779, 0
    %v788 = vsel %vm302, %v781, 0
    %v790 = vsel %vm302, %v783, 0
    %v792 = vsel %vm302, %v785, 0
    %794 = vmatprep.subr.mxu0 0.0
    %795 = vmatpush1.xpose.msra.mxu0 0.0
    %796 = vmatprep.subr.mxu0 0.0
    %797 = vmatpush1.xpose.msra.mxu0 0.0
    %798 = vmatprep.subr.mxu0 0.0
    %799 = vmatpush1.xpose.msra.mxu0 0.0
    %800 = vmatprep.subr.mxu0 0.0
    %801 = vmatpush1.xpose.msra.mxu0 0.0
    %802 = vmatprep.subr.mxu0 0.0
    %803 = vmatpush1.xpose.msra.mxu0 0.0
    %804 = vmatprep.subr.mxu0 0.0
    %805 = vmatpush1.xpose.msra.mxu0 0.0
    %806 = vmatprep.subr.mxu0 0.0
    %807 = vmatpush1.xpose.msra.mxu0 0.0
    %808 = vmatprep.subr.mxu0 0.0
    %809 = vmatpush1.xpose.msra.mxu0 0.0
    %810 = vmatprep.subr.mxu0 0.0
    %811 = vmatpush1.xpose.msra.mxu0 0.0
    %812 = vmatprep.subr.mxu0 0.0
    %813 = vmatpush1.xpose.msra.mxu0 0.0
    %814 = vmatprep.subr.mxu0 0.0
    %815 = vmatpush1.xpose.msra.mxu0 0.0
    %816 = vmatprep.subr.mxu0 0.0
    %817 = vmatpush1.xpose.msra.mxu0 0.0
    %818 = vmatprep.subr.mxu0 0.0
    %819 = vmatpush1.xpose.msra.mxu0 0.0
    %820 = vmatprep.subr.mxu0 0.0
    %821 = vmatpush1.xpose.msra.mxu0 0.0
    %822 = vmatprep.subr.mxu0 0.0
    %823 = vmatpush1.xpose.msra.mxu0 %v792
    %824 = vmatprep.subr.mxu0 0.0
    %825 = vmatpush1.xpose.msra.mxu0 %v790
    %826 = vmatprep.subr.mxu0 0.0
    %827 = vmatpush2.xpose.msra.mxu0 0.0
    %828 = vmatprep.subr.mxu0 0.0
    %829 = vmatpush2.xpose.msra.mxu0 0.0
    %830 = vmatprep.subr.mxu0 0.0
    %831 = vmatpush2.xpose.msra.mxu0 0.0
    %832 = vmatprep.subr.mxu0 0.0
    %833 = vmatpush2.xpose.msra.mxu0 0.0
    %834 = vmatprep.subr.mxu0 0.0
    %835 = vmatpush2.xpose.msra.mxu0 0.0
    %836 = vmatprep.subr.mxu0 0.0
    %837 = vmatpush2.xpose.msra.mxu0 0.0
    %838 = vmatprep.subr.mxu0 0.0
    %839 = vmatpush2.xpose.msra.mxu0 0.0
    %840 = vmatprep.subr.mxu0 0.0
    %841 = vmatpush2.xpose.msra.mxu0 0.0
    %842 = vmatprep.subr.mxu0 0.0
    %843 = vmatpush2.xpose.msra.mxu0 0.0
    %844 = vmatprep.subr.mxu0 0.0
    %845 = vmatpush2.xpose.msra.mxu0 0.0
    %846 = vmatprep.subr.mxu0 0.0
    %847 = vmatpush2.xpose.msra.mxu0 0.0
    %848 = vmatprep.subr.mxu0 0.0
    %849 = vmatpush2.xpose.msra.mxu0 0.0
    %850 = vmatprep.subr.mxu0 0.0
    %851 = vmatpush2.xpose.msra.mxu0 0.0
    %852 = vmatprep.subr.mxu0 0.0
    %853 = vmatpush2.xpose.msra.mxu0 0.0
    %854 = vmatprep.subr.mxu0 0.0
    %855 = vmatpush2.xpose.msra.mxu0 0.0
    %856 = vmatprep.subr.mxu0 0.0
    %857 = vmatpush2.xpose.msra.mxu0 0.0
    %858 = vmatprep.mubr.f32.mxu0 0.0
    %859 = vmatmul.mubr.f32.gmra.mxu0 %v786
    %v860 = vpop.f32.mrf.mxu0
    %v861 = vadd.f32 0.0, %v860
    %v862 = vpop.f32.mrf.mxu0
    %863 = vmatprep.mubr.f32.mxu0 0.0
    %864 = vmatmul.mubr.f32.gmra.mxu0 %v788
    %v865 = vpop.f32.mrf.mxu0
    %v866 = vadd.f32 0.0, %v865
    %v867 = vpop.f32.mrf.mxu0
    %868 = vdwg.mxu0
    %v869 = vmul.f32 %v770, 0.25
    %v870 = vmul.f32 %v775, 0.25
    %v871 = vmul.f32 %v861, 0.25
    %v872 = vmul.f32 %v866, 0.25
    %v873 = vsel %vm302, %v869, -inf
    %874 = vmax.xlane.f32.xlu0 %v873
    %v875 = vpop.xlane.xlu0 %874
    %v876 = vsel %vm302, %v870, -inf
    %877 = vmax.xlane.f32.xlu0 %v876
    %v878 = vpop.xlane.xlu0 %877
    %v879 = vsel %vm302, %v871, -inf
    %880 = vmax.xlane.f32.xlu0 %v879
    %v881 = vpop.xlane.xlu0 %880
    %v882 = vsel %vm302, %v872, -inf
    %883 = vmax.xlane.f32.xlu0 %v882
    %v884 = vpop.xlane.xlu0 %883
    %v885 = vsub.f32 %v869, %v875
    %v886 = vsub.f32 %v870, %v878
    %v887 = vsub.f32 %v871, %v881
    %v888 = vsub.f32 %v872, %v884
    %v889 = vmul.f32 %v885, 1.442695
    %v890 = vpow.pop %v889
    %v891 = vmul.f32 %v886, 1.442695
    %v892 = vpow.pop %v891
    %v893 = vmul.f32 %v887, 1.442695
    %v894 = vpow.pop %v893
    %v895 = vmul.f32 %v888, 1.442695
    %v896 = vpow.pop %v895
    %v897 = vsel %vm302, %v890, 0.0
    %898 = vadd.xlane.f32.xlu0 %v897
    %v899 = vpop.xlane.xlu0 %898
    %v900 = vsel %vm302, %v892, 0.0
    %901 = vadd.xlane.f32.xlu0 %v900
    %v902 = vpop.xlane.xlu0 %901
    %v903 = vsel %vm302, %v894, 0.0
    %904 = vadd.xlane.f32.xlu0 %v903
    %v905 = vpop.xlane.xlu0 %904
    %v906 = vsel %vm302, %v896, 0.0
    %907 = vadd.xlane.f32.xlu0 %v906
    %v908 = vpop.xlane.xlu0 %907
    %v909 = vrcp.pop %v899
    %v910 = vrcp.pop %v902
    %v911 = vrcp.pop %v905
    %v912 = vrcp.pop %v908
    %v913 = vmul.f32 %v890, %v909
    %v914 = vmul.f32 %v892, %v910
    %v915 = vmul.f32 %v894, %v911
    %v916 = vmul.f32 %v896, %v912
    %919 = vrot.lane.b32.xlu0 %v280, 112
    %v920 = vpop.permute.xlu0 %919
    %921 = vrot.lane.b32.xlu0 %v284, 112
    %v922 = vpop.permute.xlu0 %921
    %v926 = vsel %vm302, %v913, 0
    %v929 = vsel %vm302, %v914, 0
    %931 = vmatprep.subr.mxu0 0.0
    %932 = vmatpush1.msra.mxu0 0.0
    %933 = vmatprep.subr.mxu0 0.0
    %934 = vmatpush1.msra.mxu0 0.0
    %935 = vmatprep.subr.mxu0 0.0
    %936 = vmatpush1.msra.mxu0 0.0
    %937 = vmatprep.subr.mxu0 0.0
    %938 = vmatpush1.msra.mxu0 0.0
    %939 = vmatprep.subr.mxu0 0.0
    %940 = vmatpush1.msra.mxu0 0.0
    %941 = vmatprep.subr.mxu0 0.0
    %942 = vmatpush1.msra.mxu0 0.0
    %943 = vmatprep.subr.mxu0 0.0
    %944 = vmatpush1.msra.mxu0 0.0
    %945 = vmatprep.subr.mxu0 0.0
    %946 = vmatpush1.msra.mxu0 0.0
    %947 = vmatprep.subr.mxu0 0.0
    %948 = vmatpush1.msra.mxu0 0.0
    %949 = vmatprep.subr.mxu0 0.0
    %950 = vmatpush1.msra.mxu0 0.0
    %951 = vmatprep.subr.mxu0 0.0
    %952 = vmatpush1.msra.mxu0 0.0
    %953 = vmatprep.subr.mxu0 0.0
    %954 = vmatpush1.msra.mxu0 0.0
    %955 = vmatprep.subr.mxu0 0.0
    %956 = vmatpush1.msra.mxu0 0.0
    %957 = vmatprep.subr.mxu0 0.0
    %958 = vmatpush1.msra.mxu0 0.0
    %959 = vmatprep.subr.mxu0 0.0
    %960 = vmatpush1.msra.mxu0 %v922
    %961 = vmatprep.subr.mxu0 0.0
    %962 = vmatpush1.msra.mxu0 %v920
    %963 = vmatprep.subr.mxu0 0.0
    %964 = vmatpush2.msra.mxu0 0.0
    %965 = vmatprep.subr.mxu0 0.0
    %966 = vmatpush2.msra.mxu0 0.0
    %967 = vmatprep.subr.mxu0 0.0
    %968 = vmatpush2.msra.mxu0 0.0
    %969 = vmatprep.subr.mxu0 0.0
    %970 = vmatpush2.msra.mxu0 0.0
    %971 = vmatprep.subr.mxu0 0.0
    %972 = vmatpush2.msra.mxu0 0.0
    %973 = vmatprep.subr.mxu0 0.0
    %974 = vmatpush2.msra.mxu0 0.0
    %975 = vmatprep.subr.mxu0 0.0
    %976 = vmatpush2.msra.mxu0 0.0
    %977 = vmatprep.subr.mxu0 0.0
    %978 = vmatpush2.msra.mxu0 0.0
    %979 = vmatprep.subr.mxu0 0.0
    %980 = vmatpush2.msra.mxu0 0.0
    %981 = vmatprep.subr.mxu0 0.0
    %982 = vmatpush2.msra.mxu0 0.0
    %983 = vmatprep.subr.mxu0 0.0
    %984 = vmatpush2.msra.mxu0 0.0
    %985 = vmatprep.subr.mxu0 0.0
    %986 = vmatpush2.msra.mxu0 0.0
    %987 = vmatprep.subr.mxu0 0.0
    %988 = vmatpush2.msra.mxu0 0.0
    %989 = vmatprep.subr.mxu0 0.0
    %990 = vmatpush2.msra.mxu0 0.0
    %991 = vmatprep.subr.mxu0 0.0
    %992 = vmatpush2.msra.mxu0 0.0
    %993 = vmatprep.subr.mxu0 0.0
    %994 = vmatpush2.msra.mxu0 0.0
    %995 = vmatprep.mubr.f32.mxu0 0.0
    %996 = vmatmul.mubr.f32.gmra.mxu0 %v926
    %v997 = vpop.f32.mrf.mxu0
    %v998 = vadd.f32 0.0, %v997
    %v999 = vpop.f32.mrf.mxu0
    %1000 = vmatprep.mubr.f32.mxu0 0.0
    %1001 = vmatmul.mubr.f32.gmra.mxu0 %v929
    %v1002 = vpop.f32.mrf.mxu0
    %v1003 = vadd.f32 0.0, %v1002
    %v1004 = vpop.f32.mrf.mxu0
    %1005 = vdwg.mxu0
    %1008 = vrot.lane.b32.xlu0 %v290, 112
    %v1009 = vpop.permute.xlu0 %1008
    %1010 = vrot.lane.b32.xlu0 %v294, 112
    %v1011 = vpop.permute.xlu0 %1010
    %v1015 = vsel %vm302, %v915, 0
    %v1018 = vsel %vm302, %v916, 0
    %1020 = vmatprep.subr.mxu0 0.0
    %1021 = vmatpush1.msra.mxu0 0.0
    %1022 = vmatprep.subr.mxu0 0.0
    %1023 = vmatpush1.msra.mxu0 0.0
    %1024 = vmatprep.subr.mxu0 0.0
    %1025 = vmatpush1.msra.mxu0 0.0
    %1026 = vmatprep.subr.mxu0 0.0
    %1027 = vmatpush1.msra.mxu0 0.0
    %1028 = vmatprep.subr.mxu0 0.0
    %1029 = vmatpush1.msra.mxu0 0.0
    %1030 = vmatprep.subr.mxu0 0.0
    %1031 = vmatpush1.msra.mxu0 0.0
    %1032 = vmatprep.subr.mxu0 0.0
    %1033 = vmatpush1.msra.mxu0 0.0
    %1034 = vmatprep.subr.mxu0 0.0
    %1035 = vmatpush1.msra.mxu0 0.0
    %1036 = vmatprep.subr.mxu0 0.0
    %1037 = vmatpush1.msra.mxu0 0.0
    %1038 = vmatprep.subr.mxu0 0.0
    %1039 = vmatpush1.msra.mxu0 0.0
    %1040 = vmatprep.subr.mxu0 0.0
    %1041 = vmatpush1.msra.mxu0 0.0
    %1042 = vmatprep.subr.mxu0 0.0
    %1043 = vmatpush1.msra.mxu0 0.0
    %1044 = vmatprep.subr.mxu0 0.0
    %1045 = vmatpush1.msra.mxu0 0.0
    %1046 = vmatprep.subr.mxu0 0.0
    %1047 = vmatpush1.msra.mxu0 0.0
    %1048 = vmatprep.subr.mxu0 0.0
    %1049 = vmatpush1.msra.mxu0 %v1011
    %1050 = vmatprep.subr.mxu0 0.0
    %1051 = vmatpush1.msra.mxu0 %v1009
    %1052 = vmatprep.subr.mxu0 0.0
    %1053 = vmatpush2.msra.mxu0 0.0
    %1054 = vmatprep.subr.mxu0 0.0
    %1055 = vmatpush2.msra.mxu0 0.0
    %1056 = vmatprep.subr.mxu0 0.0
    %1057 = vmatpush2.msra.mxu0 0.0
    %1058 = vmatprep.subr.mxu0 0.0
    %1059 = vmatpush2.msra.mxu0 0.0
    %1060 = vmatprep.subr.mxu0 0.0
    %1061 = vmatpush2.msra.mxu0 0.0
    %1062 = vmatprep.subr.mxu0 0.0
    %1063 = vmatpush2.msra.mxu0 0.0
    %1064 = vmatprep.subr.mxu0 0.0
    %1065 = vmatpush2.msra.mxu0 0.0
    %1066 = vmatprep.subr.mxu0 0.0
    %1067 = vmatpush2.msra.mxu0 0.0
    %1068 = vmatprep.subr.mxu0 0.0
    %1069 = vmatpush2.msra.mxu0 0.0
    %1070 = vmatprep.subr.mxu0 0.0
    %1071 = vmatpush2.msra.mxu0 0.0
    %1072 = vmatprep.subr.mxu0 0.0
    %1073 = vmatpush2.msra.mxu0 0.0
    %1074 = vmatprep.subr.mxu0 0.0
    %1075 = vmatpush2.msra.mxu0 0.0
    %1076 = vmatprep.subr.mxu0 0.0
    %1077 = vmatpush2.msra.mxu0 0.0
    %1078 = vmatprep.subr.mxu0 0.0
    %1079 = vmatpush2.msra.mxu0 0.0
    %1080 = vmatprep.subr.mxu0 0.0
    %1081 = vmatpush2.msra.mxu0 0.0
    %1082 = vmatprep.subr.mxu0 0.0
    %1083 = vmatpush2.msra.mxu0 0.0
    %1084 = vmatprep.mubr.f32.mxu0 0.0
    %1085 = vmatmul.mubr.f32.gmra.mxu0 %v1015
    %v1086 = vpop.f32.mrf.mxu0
    %v1087 = vadd.f32 0.0, %v1086
    %v1088 = vpop.f32.mrf.mxu0
    %1089 = vmatprep.mubr.f32.mxu0 0.0
    %1090 = vmatmul.mubr.f32.gmra.mxu0 %v1018
    %v1091 = vpop.f32.mrf.mxu0
    %v1092 = vadd.f32 0.0, %v1091
    %v1093 = vpop.f32.mrf.mxu0
    %1094 = vdwg.mxu0
    %v1095 = vpack.c.bf16 %v1003, %v998
    %v1096 = vpack.c.bf16 %v1092, %v1087
    %v1099 = vunpack.c.l.b16 %v65
    %v1100 = vunpack.c.l.b16 %v66
    %v1101 = vpack.c.b16 %v1100, %v1099
    %v1104 = vsel %vm302, %v1095, 0
    %v1107 = vsel %vm302, %v1096, 0
    %1109 = vmatprep.subr.bf16.mxu0 0
    %1110 = vmatpush1.bf16.msra.mxu0 0
    %1111 = vmatprep.subr.bf16.mxu0 0
    %1112 = vmatpush1.bf16.msra.mxu0 0
    %1113 = vmatprep.subr.bf16.mxu0 0
    %1114 = vmatpush1.bf16.msra.mxu0 0
    %1115 = vmatprep.subr.bf16.mxu0 0
    %1116 = vmatpush1.bf16.msra.mxu0 0
    %1117 = vmatprep.subr.bf16.mxu0 0
    %1118 = vmatpush1.bf16.msra.mxu0 0
    %1119 = vmatprep.subr.bf16.mxu0 0
    %1120 = vmatpush1.bf16.msra.mxu0 0
    %1121 = vmatprep.subr.bf16.mxu0 0
    %1122 = vmatpush1.bf16.msra.mxu0 0
    %1123 = vmatprep.subr.bf16.mxu0 0
    %1124 = vmatpush1.bf16.msra.mxu0 %v1101
    %1125 = vmatprep.subr.bf16.mxu0 0
    %1126 = vmatpush2.bf16.msra.mxu0 0
    %1127 = vmatprep.subr.bf16.mxu0 0
    %1128 = vmatpush2.bf16.msra.mxu0 0
    %1129 = vmatprep.subr.bf16.mxu0 0
    %1130 = vmatpush2.bf16.msra.mxu0 0
    %1131 = vmatprep.subr.bf16.mxu0 0
    %1132 = vmatpush2.bf16.msra.mxu0 0
    %1133 = vmatprep.subr.bf16.mxu0 0
    %1134 = vmatpush2.bf16.msra.mxu0 0
    %1135 = vmatprep.subr.bf16.mxu0 0
    %1136 = vmatpush2.bf16.msra.mxu0 0
    %1137 = vmatprep.subr.bf16.mxu0 0
    %1138 = vmatpush2.bf16.msra.mxu0 0
    %1139 = vmatprep.subr.bf16.mxu0 0
    %1140 = vmatpush2.bf16.msra.mxu0 0
    %1141 = vmatprep.mubr.bf16.mxu0 0
    %1142 = vmatmul.mubr.bf16.gmra.mxu0 %v1104
    %v1143 = vpop.f32.mrf.mxu0
    %v1144 = vadd.f32 0.0, %v1143
    %v1145 = vpop.f32.mrf.mxu0
    %v1146 = vpop.f32.mrf.mxu0
    %v1147 = vadd.f32 0.0, %v1146
    %v1148 = vpop.f32.mrf.mxu0
    %1149 = vmatprep.mubr.bf16.mxu0 0
    %1150 = vmatmul.mubr.bf16.gmra.mxu0 %v1107
    %v1151 = vpop.f32.mrf.mxu0
    %v1152 = vadd.f32 0.0, %v1151
    %v1153 = vpop.f32.mrf.mxu0
    %v1154 = vpop.f32.mrf.mxu0
    %v1155 = vadd.f32 0.0, %v1154
    %v1156 = vpop.f32.mrf.mxu0
    %1157 = vdwg.mxu0
    %v1160 = vunpack.c.l.b16 %v63
    %v1161 = vunpack.c.l.b16 %v64
    %v1162 = vpack.c.b16 %v1161, %v1160
    %v1165 = vsel %vm302, %v685, 0
    %v1168 = vsel %vm302, %v686, 0
    %1170 = vmatprep.subr.bf16.mxu0 0
    %1171 = vmatpush1.bf16.msra.mxu0 0
    %1172 = vmatprep.subr.bf16.mxu0 0
    %1173 = vmatpush1.bf16.msra.mxu0 0
    %1174 = vmatprep.subr.bf16.mxu0 0
    %1175 = vmatpush1.bf16.msra.mxu0 0
    %1176 = vmatprep.subr.bf16.mxu0 0
    %1177 = vmatpush1.bf16.msra.mxu0 0
    %1178 = vmatprep.subr.bf16.mxu0 0
    %1179 = vmatpush1.bf16.msra.mxu0 0
    %1180 = vmatprep.subr.bf16.mxu0 0
    %1181 = vmatpush1.bf16.msra.mxu0 0
    %1182 = vmatprep.subr.bf16.mxu0 0
    %1183 = vmatpush1.bf16.msra.mxu0 0
    %1184 = vmatprep.subr.bf16.mxu0 0
    %1185 = vmatpush1.bf16.msra.mxu0 %v1162
    %1186 = vmatprep.subr.bf16.mxu0 0
    %1187 = vmatpush2.bf16.msra.mxu0 0
    %1188 = vmatprep.subr.bf16.mxu0 0
    %1189 = vmatpush2.bf16.msra.mxu0 0
    %1190 = vmatprep.subr.bf16.mxu0 0
    %1191 = vmatpush2.bf16.msra.mxu0 0
    %1192 = vmatprep.subr.bf16.mxu0 0
    %1193 = vmatpush2.bf16.msra.mxu0 0
    %1194 = vmatprep.subr.bf16.mxu0 0
    %1195 = vmatpush2.bf16.msra.mxu0 0
    %1196 = vmatprep.subr.bf16.mxu0 0
    %1197 = vmatpush2.bf16.msra.mxu0 0
    %1198 = vmatprep.subr.bf16.mxu0 0
    %1199 = vmatpush2.bf16.msra.mxu0 0
    %1200 = vmatprep.subr.bf16.mxu0 0
    %1201 = vmatpush2.bf16.msra.mxu0 0
    %1202 = vmatprep.mubr.bf16.mxu0 0
    %1203 = vmatmul.mubr.bf16.gmra.mxu0 %v1165
    %v1204 = vpop.f32.mrf.mxu0
    %v1205 = vadd.f32 %v1144, %v1204
    %v1206 = vpop.f32.mrf.mxu0
    %v1207 = vpop.f32.mrf.mxu0
    %v1208 = vadd.f32 %v1147, %v1207
    %v1209 = vpop.f32.mrf.mxu0
    %1210 = vmatprep.mubr.bf16.mxu0 0
    %1211 = vmatmul.mubr.bf16.gmra.mxu0 %v1168
    %v1212 = vpop.f32.mrf.mxu0
    %v1213 = vadd.f32 %v1152, %v1212
    %v1214 = vpop.f32.mrf.mxu0
    %v1215 = vpop.f32.mrf.mxu0
    %v1216 = vadd.f32 %v1155, %v1215
    %v1217 = vpop.f32.mrf.mxu0
    %1218 = vdwg.mxu0
    %1219 = vrot.lane.b32.xlu0 %v278, 96
    %v1220 = vpop.permute.xlu0 %1219
    %1221 = vrot.lane.b32.xlu0 %v282, 96
    %v1222 = vpop.permute.xlu0 %1221
    %1223 = vrot.lane.b32.xlu0 %v278, 32
    %v1224 = vpop.permute.xlu0 %1223
    %1225 = vrot.lane.b32.xlu0 %v282, 32
    %v1226 = vpop.permute.xlu0 %1225
    %v1227 = vsel %vm302, %v1220, 0
    %v1229 = vsel %vm302, %v1222, 0
    %v1231 = vsel %vm302, %v1224, 0
    %v1233 = vsel %vm302, %v1226, 0
    %1235 = vmatprep.subr.mxu0 0.0
    %1236 = vmatpush1.xpose.msra.mxu0 0.0
    %1237 = vmatprep.subr.mxu0 0.0
    %1238 = vmatpush1.xpose.msra.mxu0 0.0
    %1239 = vmatprep.subr.mxu0 0.0
    %1240 = vmatpush1.xpose.msra.mxu0 0.0
    %1241 = vmatprep.subr.mxu0 0.0
    %1242 = vmatpush1.xpose.msra.mxu0 0.0
    %1243 = vmatprep.subr.mxu0 0.0
    %1244 = vmatpush1.xpose.msra.mxu0 0.0
    %1245 = vmatprep.subr.mxu0 0.0
    %1246 = vmatpush1.xpose.msra.mxu0 0.0
    %1247 = vmatprep.subr.mxu0 0.0
    %1248 = vmatpush1.xpose.msra.mxu0 0.0
    %1249 = vmatprep.subr.mxu0 0.0
    %1250 = vmatpush1.xpose.msra.mxu0 0.0
    %1251 = vmatprep.subr.mxu0 0.0
    %1252 = vmatpush1.xpose.msra.mxu0 0.0
    %1253 = vmatprep.subr.mxu0 0.0
    %1254 = vmatpush1.xpose.msra.mxu0 0.0
    %1255 = vmatprep.subr.mxu0 0.0
    %1256 = vmatpush1.xpose.msra.mxu0 0.0
    %1257 = vmatprep.subr.mxu0 0.0
    %1258 = vmatpush1.xpose.msra.mxu0 0.0
    %1259 = vmatprep.subr.mxu0 0.0
    %1260 = vmatpush1.xpose.msra.mxu0 0.0
    %1261 = vmatprep.subr.mxu0 0.0
    %1262 = vmatpush1.xpose.msra.mxu0 0.0
    %1263 = vmatprep.subr.mxu0 0.0
    %1264 = vmatpush1.xpose.msra.mxu0 %v1233
    %1265 = vmatprep.subr.mxu0 0.0
    %1266 = vmatpush1.xpose.msra.mxu0 %v1231
    %1267 = vmatprep.subr.mxu0 0.0
    %1268 = vmatpush2.xpose.msra.mxu0 0.0
    %1269 = vmatprep.subr.mxu0 0.0
    %1270 = vmatpush2.xpose.msra.mxu0 0.0
    %1271 = vmatprep.subr.mxu0 0.0
    %1272 = vmatpush2.xpose.msra.mxu0 0.0
    %1273 = vmatprep.subr.mxu0 0.0
    %1274 = vmatpush2.xpose.msra.mxu0 0.0
    %1275 = vmatprep.subr.mxu0 0.0
    %1276 = vmatpush2.xpose.msra.mxu0 0.0
    %1277 = vmatprep.subr.mxu0 0.0
    %1278 = vmatpush2.xpose.msra.mxu0 0.0
    %1279 = vmatprep.subr.mxu0 0.0
    %1280 = vmatpush2.xpose.msra.mxu0 0.0
    %1281 = vmatprep.subr.mxu0 0.0
    %1282 = vmatpush2.xpose.msra.mxu0 0.0
    %1283 = vmatprep.subr.mxu0 0.0
    %1284 = vmatpush2.xpose.msra.mxu0 0.0
    %1285 = vmatprep.subr.mxu0 0.0
    %1286 = vmatpush2.xpose.msra.mxu0 0.0
    %1287 = vmatprep.subr.mxu0 0.0
    %1288 = vmatpush2.xpose.msra.mxu0 0.0
    %1289 = vmatprep.subr.mxu0 0.0
    %1290 = vmatpush2.xpose.msra.mxu0 0.0
    %1291 = vmatprep.subr.mxu0 0.0
    %1292 = vmatpush2.xpose.msra.mxu0 0.0
    %1293 = vmatprep.subr.mxu0 0.0
    %1294 = vmatpush2.xpose.msra.mxu0 0.0
    %1295 = vmatprep.subr.mxu0 0.0
    %1296 = vmatpush2.xpose.msra.mxu0 0.0
    %1297 = vmatprep.subr.mxu0 0.0
    %1298 = vmatpush2.xpose.msra.mxu0 0.0
    %1299 = vmatprep.mubr.f32.mxu0 0.0
    %1300 = vmatmul.mubr.f32.gmra.mxu0 %v1227
    %v1301 = vpop.f32.mrf.mxu0
    %v1302 = vadd.f32 0.0, %v1301
    %v1303 = vpop.f32.mrf.mxu0
    %1304 = vmatprep.mubr.f32.mxu0 0.0
    %1305 = vmatmul.mubr.f32.gmra.mxu0 %v1229
    %v1306 = vpop.f32.mrf.mxu0
    %v1307 = vadd.f32 0.0, %v1306
    %v1308 = vpop.f32.mrf.mxu0
    %1309 = vdwg.mxu0
    %1310 = vrot.lane.b32.xlu0 %v288, 96
    %v1311 = vpop.permute.xlu0 %1310
    %1312 = vrot.lane.b32.xlu0 %v292, 96
    %v1313 = vpop.permute.xlu0 %1312
    %1314 = vrot.lane.b32.xlu0 %v288, 32
    %v1315 = vpop.permute.xlu0 %1314
    %1316 = vrot.lane.b32.xlu0 %v292, 32
    %v1317 = vpop.permute.xlu0 %1316
    %v1318 = vsel %vm302, %v1311, 0
    %v1320 = vsel %vm302, %v1313, 0
    %v1322 = vsel %vm302, %v1315, 0
    %v1324 = vsel %vm302, %v1317, 0
    %1326 = vmatprep.subr.mxu0 0.0
    %1327 = vmatpush1.xpose.msra.mxu0 0.0
    %1328 = vmatprep.subr.mxu0 0.0
    %1329 = vmatpush1.xpose.msra.mxu0 0.0
    %1330 = vmatprep.subr.mxu0 0.0
    %1331 = vmatpush1.xpose.msra.mxu0 0.0
    %1332 = vmatprep.subr.mxu0 0.0
    %1333 = vmatpush1.xpose.msra.mxu0 0.0
    %1334 = vmatprep.subr.mxu0 0.0
    %1335 = vmatpush1.xpose.msra.mxu0 0.0
    %1336 = vmatprep.subr.mxu0 0.0
    %1337 = vmatpush1.xpose.msra.mxu0 0.0
    %1338 = vmatprep.subr.mxu0 0.0
    %1339 = vmatpush1.xpose.msra.mxu0 0.0
    %1340 = vmatprep.subr.mxu0 0.0
    %1341 = vmatpush1.xpose.msra.mxu0 0.0
    %1342 = vmatprep.subr.mxu0 0.0
    %1343 = vmatpush1.xpose.msra.mxu0 0.0
    %1344 = vmatprep.subr.mxu0 0.0
    %1345 = vmatpush1.xpose.msra.mxu0 0.0
    %1346 = vmatprep.subr.mxu0 0.0
    %1347 = vmatpush1.xpose.msra.mxu0 0.0
    %1348 = vmatprep.subr.mxu0 0.0
    %1349 = vmatpush1.xpose.msra.mxu0 0.0
    %1350 = vmatprep.subr.mxu0 0.0
    %1351 = vmatpush1.xpose.msra.mxu0 0.0
    %1352 = vmatprep.subr.mxu0 0.0
    %1353 = vmatpush1.xpose.msra.mxu0 0.0
    %1354 = vmatprep.subr.mxu0 0.0
    %1355 = vmatpush1.xpose.msra.mxu0 %v1324
    %1356 = vmatprep.subr.mxu0 0.0
    %1357 = vmatpush1.xpose.msra.mxu0 %v1322
    %1358 = vmatprep.subr.mxu0 0.0
    %1359 = vmatpush2.xpose.msra.mxu0 0.0
    %1360 = vmatprep.subr.mxu0 0.0
    %1361 = vmatpush2.xpose.msra.mxu0 0.0
    %1362 = vmatprep.subr.mxu0 0.0
    %1363 = vmatpush2.xpose.msra.mxu0 0.0
    %1364 = vmatprep.subr.mxu0 0.0
    %1365 = vmatpush2.xpose.msra.mxu0 0.0
    %1366 = vmatprep.subr.mxu0 0.0
    %1367 = vmatpush2.xpose.msra.mxu0 0.0
    %1368 = vmatprep.subr.mxu0 0.0
    %1369 = vmatpush2.xpose.msra.mxu0 0.0
    %1370 = vmatprep.subr.mxu0 0.0
    %1371 = vmatpush2.xpose.msra.mxu0 0.0
    %1372 = vmatprep.subr.mxu0 0.0
    %1373 = vmatpush2.xpose.msra.mxu0 0.0
    %1374 = vmatprep.subr.mxu0 0.0
    %1375 = vmatpush2.xpose.msra.mxu0 0.0
    %1376 = vmatprep.subr.mxu0 0.0
    %1377 = vmatpush2.xpose.msra.mxu0 0.0
    %1378 = vmatprep.subr.mxu0 0.0
    %1379 = vmatpush2.xpose.msra.mxu0 0.0
    %1380 = vmatprep.subr.mxu0 0.0
    %1381 = vmatpush2.xpose.msra.mxu0 0.0
    %1382 = vmatprep.subr.mxu0 0.0
    %1383 = vmatpush2.xpose.msra.mxu0 0.0
    %1384 = vmatprep.subr.mxu0 0.0
    %1385 = vmatpush2.xpose.msra.mxu0 0.0
    %1386 = vmatprep.subr.mxu0 0.0
    %1387 = vmatpush2.xpose.msra.mxu0 0.0
    %1388 = vmatprep.subr.mxu0 0.0
    %1389 = vmatpush2.xpose.msra.mxu0 0.0
    %1390 = vmatprep.mubr.f32.mxu0 0.0
    %1391 = vmatmul.mubr.f32.gmra.mxu0 %v1318
    %v1392 = vpop.f32.mrf.mxu0
    %v1393 = vadd.f32 0.0, %v1392
    %v1394 = vpop.f32.mrf.mxu0
    %1395 = vmatprep.mubr.f32.mxu0 0.0
    %1396 = vmatmul.mubr.f32.gmra.mxu0 %v1320
    %v1397 = vpop.f32.mrf.mxu0
    %v1398 = vadd.f32 0.0, %v1397
    %v1399 = vpop.f32.mrf.mxu0
    %1400 = vdwg.mxu0
    %v1401 = vmul.f32 %v1302, 0.25
    %v1402 = vmul.f32 %v1307, 0.25
    %v1403 = vmul.f32 %v1393, 0.25
    %v1404 = vmul.f32 %v1398, 0.25
    %v1405 = vsel %vm302, %v1401, -inf
    %1406 = vmax.xlane.f32.xlu0 %v1405
    %v1407 = vpop.xlane.xlu0 %1406
    %v1408 = vsel %vm302, %v1402, -inf
    %1409 = vmax.xlane.f32.xlu0 %v1408
    %v1410 = vpop.xlane.xlu0 %1409
    %v1411 = vsel %vm302, %v1403, -inf
    %1412 = vmax.xlane.f32.xlu0 %v1411
    %v1413 = vpop.xlane.xlu0 %1412
    %v1414 = vsel %vm302, %v1404, -inf
    %1415 = vmax.xlane.f32.xlu0 %v1414
    %v1416 = vpop.xlane.xlu0 %1415
    %v1417 = vsub.f32 %v1401, %v1407
    %v1418 = vsub.f32 %v1402, %v1410
    %v1419 = vsub.f32 %v1403, %v1413
    %v1420 = vsub.f32 %v1404, %v1416
    %v1421 = vmul.f32 %v1417, 1.442695
    %v1422 = vpow.pop %v1421
    %v1423 = vmul.f32 %v1418, 1.442695
    %v1424 = vpow.pop %v1423
    %v1425 = vmul.f32 %v1419, 1.442695
    %v1426 = vpow.pop %v1425
    %v1427 = vmul.f32 %v1420, 1.442695
    %v1428 = vpow.pop %v1427
    %v1429 = vsel %vm302, %v1422, 0.0
    %1430 = vadd.xlane.f32.xlu0 %v1429
    %v1431 = vpop.xlane.xlu0 %1430
    %v1432 = vsel %vm302, %v1424, 0.0
    %1433 = vadd.xlane.f32.xlu0 %v1432
    %v1434 = vpop.xlane.xlu0 %1433
    %v1435 = vsel %vm302, %v1426, 0.0
    %1436 = vadd.xlane.f32.xlu0 %v1435
    %v1437 = vpop.xlane.xlu0 %1436
    %v1438 = vsel %vm302, %v1428, 0.0
    %1439 = vadd.xlane.f32.xlu0 %v1438
    %v1440 = vpop.xlane.xlu0 %1439
    %v1441 = vrcp.pop %v1431
    %v1442 = vrcp.pop %v1434
    %v1443 = vrcp.pop %v1437
    %v1444 = vrcp.pop %v1440
    %v1445 = vmul.f32 %v1422, %v1441
    %v1446 = vmul.f32 %v1424, %v1442
    %v1447 = vmul.f32 %v1426, %v1443
    %v1448 = vmul.f32 %v1428, %v1444
    %1449 = vrot.lane.b32.xlu0 %v280, 96
    %v1450 = vpop.permute.xlu0 %1449
    %1451 = vrot.lane.b32.xlu0 %v284, 96
    %v1452 = vpop.permute.xlu0 %1451
    %v1456 = vsel %vm302, %v1445, 0
    %v1459 = vsel %vm302, %v1446, 0
    %1461 = vmatprep.subr.mxu0 0.0
    %1462 = vmatpush1.msra.mxu0 0.0
    %1463 = vmatprep.subr.mxu0 0.0
    %1464 = vmatpush1.msra.mxu0 0.0
    %1465 = vmatprep.subr.mxu0 0.0
    %1466 = vmatpush1.msra.mxu0 0.0
    %1467 = vmatprep.subr.mxu0 0.0
    %1468 = vmatpush1.msra.mxu0 0.0
    %1469 = vmatprep.subr.mxu0 0.0
    %1470 = vmatpush1.msra.mxu0 0.0
    %1471 = vmatprep.subr.mxu0 0.0
    %1472 = vmatpush1.msra.mxu0 0.0
    %1473 = vmatprep.subr.mxu0 0.0
    %1474 = vmatpush1.msra.mxu0 0.0
    %1475 = vmatprep.subr.mxu0 0.0
    %1476 = vmatpush1.msra.mxu0 0.0
    %1477 = vmatprep.subr.mxu0 0.0
    %1478 = vmatpush1.msra.mxu0 0.0
    %1479 = vmatprep.subr.mxu0 0.0
    %1480 = vmatpush1.msra.mxu0 0.0
    %1481 = vmatprep.subr.mxu0 0.0
    %1482 = vmatpush1.msra.mxu0 0.0
    %1483 = vmatprep.subr.mxu0 0.0
    %1484 = vmatpush1.msra.mxu0 0.0
    %1485 = vmatprep.subr.mxu0 0.0
    %1486 = vmatpush1.msra.mxu0 0.0
    %1487 = vmatprep.subr.mxu0 0.0
    %1488 = vmatpush1.msra.mxu0 0.0
    %1489 = vmatprep.subr.mxu0 0.0
    %1490 = vmatpush1.msra.mxu0 %v1452
    %1491 = vmatprep.subr.mxu0 0.0
    %1492 = vmatpush1.msra.mxu0 %v1450
    %1493 = vmatprep.subr.mxu0 0.0
    %1494 = vmatpush2.msra.mxu0 0.0
    %1495 = vmatprep.subr.mxu0 0.0
    %1496 = vmatpush2.msra.mxu0 0.0
    %1497 = vmatprep.subr.mxu0 0.0
    %1498 = vmatpush2.msra.mxu0 0.0
    %1499 = vmatprep.subr.mxu0 0.0
    %1500 = vmatpush2.msra.mxu0 0.0
    %1501 = vmatprep.subr.mxu0 0.0
    %1502 = vmatpush2.msra.mxu0 0.0
    %1503 = vmatprep.subr.mxu0 0.0
    %1504 = vmatpush2.msra.mxu0 0.0
    %1505 = vmatprep.subr.mxu0 0.0
    %1506 = vmatpush2.msra.mxu0 0.0
    %1507 = vmatprep.subr.mxu0 0.0
    %1508 = vmatpush2.msra.mxu0 0.0
    %1509 = vmatprep.subr.mxu0 0.0
    %1510 = vmatpush2.msra.mxu0 0.0
    %1511 = vmatprep.subr.mxu0 0.0
    %1512 = vmatpush2.msra.mxu0 0.0
    %1513 = vmatprep.subr.mxu0 0.0
    %1514 = vmatpush2.msra.mxu0 0.0
    %1515 = vmatprep.subr.mxu0 0.0
    %1516 = vmatpush2.msra.mxu0 0.0
    %1517 = vmatprep.subr.mxu0 0.0
    %1518 = vmatpush2.msra.mxu0 0.0
    %1519 = vmatprep.subr.mxu0 0.0
    %1520 = vmatpush2.msra.mxu0 0.0
    %1521 = vmatprep.subr.mxu0 0.0
    %1522 = vmatpush2.msra.mxu0 0.0
    %1523 = vmatprep.subr.mxu0 0.0
    %1524 = vmatpush2.msra.mxu0 0.0
    %1525 = vmatprep.mubr.f32.mxu0 0.0
    %1526 = vmatmul.mubr.f32.gmra.mxu0 %v1456
    %v1527 = vpop.f32.mrf.mxu0
    %v1528 = vadd.f32 0.0, %v1527
    %v1529 = vpop.f32.mrf.mxu0
    %1530 = vmatprep.mubr.f32.mxu0 0.0
    %1531 = vmatmul.mubr.f32.gmra.mxu0 %v1459
    %v1532 = vpop.f32.mrf.mxu0
    %v1533 = vadd.f32 0.0, %v1532
    %v1534 = vpop.f32.mrf.mxu0
    %1535 = vdwg.mxu0
    %1536 = vrot.lane.b32.xlu0 %v290, 96
    %v1537 = vpop.permute.xlu0 %1536
    %1538 = vrot.lane.b32.xlu0 %v294, 96
    %v1539 = vpop.permute.xlu0 %1538
    %v1543 = vsel %vm302, %v1447, 0
    %v1546 = vsel %vm302, %v1448, 0
    %1548 = vmatprep.subr.mxu0 0.0
    %1549 = vmatpush1.msra.mxu0 0.0
    %1550 = vmatprep.subr.mxu0 0.0
    %1551 = vmatpush1.msra.mxu0 0.0
    %1552 = vmatprep.subr.mxu0 0.0
    %1553 = vmatpush1.msra.mxu0 0.0
    %1554 = vmatprep.subr.mxu0 0.0
    %1555 = vmatpush1.msra.mxu0 0.0
    %1556 = vmatprep.subr.mxu0 0.0
    %1557 = vmatpush1.msra.mxu0 0.0
    %1558 = vmatprep.subr.mxu0 0.0
    %1559 = vmatpush1.msra.mxu0 0.0
    %1560 = vmatprep.subr.mxu0 0.0
    %1561 = vmatpush1.msra.mxu0 0.0
    %1562 = vmatprep.subr.mxu0 0.0
    %1563 = vmatpush1.msra.mxu0 0.0
    %1564 = vmatprep.subr.mxu0 0.0
    %1565 = vmatpush1.msra.mxu0 0.0
    %1566 = vmatprep.subr.mxu0 0.0
    %1567 = vmatpush1.msra.mxu0 0.0
    %1568 = vmatprep.subr.mxu0 0.0
    %1569 = vmatpush1.msra.mxu0 0.0
    %1570 = vmatprep.subr.mxu0 0.0
    %1571 = vmatpush1.msra.mxu0 0.0
    %1572 = vmatprep.subr.mxu0 0.0
    %1573 = vmatpush1.msra.mxu0 0.0
    %1574 = vmatprep.subr.mxu0 0.0
    %1575 = vmatpush1.msra.mxu0 0.0
    %1576 = vmatprep.subr.mxu0 0.0
    %1577 = vmatpush1.msra.mxu0 %v1539
    %1578 = vmatprep.subr.mxu0 0.0
    %1579 = vmatpush1.msra.mxu0 %v1537
    %1580 = vmatprep.subr.mxu0 0.0
    %1581 = vmatpush2.msra.mxu0 0.0
    %1582 = vmatprep.subr.mxu0 0.0
    %1583 = vmatpush2.msra.mxu0 0.0
    %1584 = vmatprep.subr.mxu0 0.0
    %1585 = vmatpush2.msra.mxu0 0.0
    %1586 = vmatprep.subr.mxu0 0.0
    %1587 = vmatpush2.msra.mxu0 0.0
    %1588 = vmatprep.subr.mxu0 0.0
    %1589 = vmatpush2.msra.mxu0 0.0
    %1590 = vmatprep.subr.mxu0 0.0
    %1591 = vmatpush2.msra.mxu0 0.0
    %1592 = vmatprep.subr.mxu0 0.0
    %1593 = vmatpush2.msra.mxu0 0.0
    %1594 = vmatprep.subr.mxu0 0.0
    %1595 = vmatpush2.msra.mxu0 0.0
    %1596 = vmatprep.subr.mxu0 0.0
    %1597 = vmatpush2.msra.mxu0 0.0
    %1598 = vmatprep.subr.mxu0 0.0
    %1599 = vmatpush2.msra.mxu0 0.0
    %1600 = vmatprep.subr.mxu0 0.0
    %1601 = vmatpush2.msra.mxu0 0.0
    %1602 = vmatprep.subr.mxu0 0.0
    %1603 = vmatpush2.msra.mxu0 0.0
    %1604 = vmatprep.subr.mxu0 0.0
    %1605 = vmatpush2.msra.mxu0 0.0
    %1606 = vmatprep.subr.mxu0 0.0
    %1607 = vmatpush2.msra.mxu0 0.0
    %1608 = vmatprep.subr.mxu0 0.0
    %1609 = vmatpush2.msra.mxu0 0.0
    %1610 = vmatprep.subr.mxu0 0.0
    %1611 = vmatpush2.msra.mxu0 0.0
    %1612 = vmatprep.mubr.f32.mxu0 0.0
    %1613 = vmatmul.mubr.f32.gmra.mxu0 %v1543
    %v1614 = vpop.f32.mrf.mxu0
    %v1615 = vadd.f32 0.0, %v1614
    %v1616 = vpop.f32.mrf.mxu0
    %1617 = vmatprep.mubr.f32.mxu0 0.0
    %1618 = vmatmul.mubr.f32.gmra.mxu0 %v1546
    %v1619 = vpop.f32.mrf.mxu0
    %v1620 = vadd.f32 0.0, %v1619
    %v1621 = vpop.f32.mrf.mxu0
    %1622 = vdwg.mxu0
    %v1623 = vpack.c.bf16 %v1533, %v1528
    %v1624 = vpack.c.bf16 %v1620, %v1615
    %v1627 = vunpack.c.l.b16 %v67
    %v1628 = vunpack.c.l.b16 %v68
    %v1629 = vpack.c.b16 %v1628, %v1627
    %v1632 = vsel %vm302, %v1623, 0
    %v1635 = vsel %vm302, %v1624, 0
    %1637 = vmatprep.subr.bf16.mxu0 0
    %1638 = vmatpush1.bf16.msra.mxu0 0
    %1639 = vmatprep.subr.bf16.mxu0 0
    %1640 = vmatpush1.bf16.msra.mxu0 0
    %1641 = vmatprep.subr.bf16.mxu0 0
    %1642 = vmatpush1.bf16.msra.mxu0 0
    %1643 = vmatprep.subr.bf16.mxu0 0
    %1644 = vmatpush1.bf16.msra.mxu0 0
    %1645 = vmatprep.subr.bf16.mxu0 0
    %1646 = vmatpush1.bf16.msra.mxu0 0
    %1647 = vmatprep.subr.bf16.mxu0 0
    %1648 = vmatpush1.bf16.msra.mxu0 0
    %1649 = vmatprep.subr.bf16.mxu0 0
    %1650 = vmatpush1.bf16.msra.mxu0 0
    %1651 = vmatprep.subr.bf16.mxu0 0
    %1652 = vmatpush1.bf16.msra.mxu0 %v1629
    %1653 = vmatprep.subr.bf16.mxu0 0
    %1654 = vmatpush2.bf16.msra.mxu0 0
    %1655 = vmatprep.subr.bf16.mxu0 0
    %1656 = vmatpush2.bf16.msra.mxu0 0
    %1657 = vmatprep.subr.bf16.mxu0 0
    %1658 = vmatpush2.bf16.msra.mxu0 0
    %1659 = vmatprep.subr.bf16.mxu0 0
    %1660 = vmatpush2.bf16.msra.mxu0 0
    %1661 = vmatprep.subr.bf16.mxu0 0
    %1662 = vmatpush2.bf16.msra.mxu0 0
    %1663 = vmatprep.subr.bf16.mxu0 0
    %1664 = vmatpush2.bf16.msra.mxu0 0
    %1665 = vmatprep.subr.bf16.mxu0 0
    %1666 = vmatpush2.bf16.msra.mxu0 0
    %1667 = vmatprep.subr.bf16.mxu0 0
    %1668 = vmatpush2.bf16.msra.mxu0 0
    %1669 = vmatprep.mubr.bf16.mxu0 0
    %1670 = vmatmul.mubr.bf16.gmra.mxu0 %v1632
    %v1671 = vpop.f32.mrf.mxu0
    %v1672 = vadd.f32 0.0, %v1671
    %v1673 = vpop.f32.mrf.mxu0
    %v1674 = vpop.f32.mrf.mxu0
    %v1675 = vadd.f32 0.0, %v1674
    %v1676 = vpop.f32.mrf.mxu0
    %1677 = vmatprep.mubr.bf16.mxu0 0
    %1678 = vmatmul.mubr.bf16.gmra.mxu0 %v1635
    %v1679 = vpop.f32.mrf.mxu0
    %v1680 = vadd.f32 0.0, %v1679
    %v1681 = vpop.f32.mrf.mxu0
    %v1682 = vpop.f32.mrf.mxu0
    %v1683 = vadd.f32 0.0, %v1682
    %v1684 = vpop.f32.mrf.mxu0
    %1685 = vdwg.mxu0
    %v1686 = vadd.f32 %v1205, %v1672
    %v1687 = vadd.f32 %v1208, %v1675
    %v1688 = vadd.f32 %v1213, %v1680
    %v1689 = vadd.f32 %v1216, %v1683
    %1690 = vrot.lane.b32.xlu0 %v278, 80
    %v1691 = vpop.permute.xlu0 %1690
    %1692 = vrot.lane.b32.xlu0 %v282, 80
    %v1693 = vpop.permute.xlu0 %1692
    %1694 = vrot.lane.b32.xlu0 %v278, 16
    %v1695 = vpop.permute.xlu0 %1694
    %1696 = vrot.lane.b32.xlu0 %v282, 16
    %v1697 = vpop.permute.xlu0 %1696
    %v1698 = vsel %vm302, %v1691, 0
    %v1700 = vsel %vm302, %v1693, 0
    %v1702 = vsel %vm302, %v1695, 0
    %v1704 = vsel %vm302, %v1697, 0
    %1706 = vmatprep.subr.mxu0 0.0
    %1707 = vmatpush1.xpose.msra.mxu0 0.0
    %1708 = vmatprep.subr.mxu0 0.0
    %1709 = vmatpush1.xpose.msra.mxu0 0.0
    %1710 = vmatprep.subr.mxu0 0.0
    %1711 = vmatpush1.xpose.msra.mxu0 0.0
    %1712 = vmatprep.subr.mxu0 0.0
    %1713 = vmatpush1.xpose.msra.mxu0 0.0
    %1714 = vmatprep.subr.mxu0 0.0
    %1715 = vmatpush1.xpose.msra.mxu0 0.0
    %1716 = vmatprep.subr.mxu0 0.0
    %1717 = vmatpush1.xpose.msra.mxu0 0.0
    %1718 = vmatprep.subr.mxu0 0.0
    %1719 = vmatpush1.xpose.msra.mxu0 0.0
    %1720 = vmatprep.subr.mxu0 0.0
    %1721 = vmatpush1.xpose.msra.mxu0 0.0
    %1722 = vmatprep.subr.mxu0 0.0
    %1723 = vmatpush1.xpose.msra.mxu0 0.0
    %1724 = vmatprep.subr.mxu0 0.0
    %1725 = vmatpush1.xpose.msra.mxu0 0.0
    %1726 = vmatprep.subr.mxu0 0.0
    %1727 = vmatpush1.xpose.msra.mxu0 0.0
    %1728 = vmatprep.subr.mxu0 0.0
    %1729 = vmatpush1.xpose.msra.mxu0 0.0
    %1730 = vmatprep.subr.mxu0 0.0
    %1731 = vmatpush1.xpose.msra.mxu0 0.0
    %1732 = vmatprep.subr.mxu0 0.0
    %1733 = vmatpush1.xpose.msra.mxu0 0.0
    %1734 = vmatprep.subr.mxu0 0.0
    %1735 = vmatpush1.xpose.msra.mxu0 %v1704
    %1736 = vmatprep.subr.mxu0 0.0
    %1737 = vmatpush1.xpose.msra.mxu0 %v1702
    %1738 = vmatprep.subr.mxu0 0.0
    %1739 = vmatpush2.xpose.msra.mxu0 0.0
    %1740 = vmatprep.subr.mxu0 0.0
    %1741 = vmatpush2.xpose.msra.mxu0 0.0
    %1742 = vmatprep.subr.mxu0 0.0
    %1743 = vmatpush2.xpose.msra.mxu0 0.0
    %1744 = vmatprep.subr.mxu0 0.0
    %1745 = vmatpush2.xpose.msra.mxu0 0.0
    %1746 = vmatprep.subr.mxu0 0.0
    %1747 = vmatpush2.xpose.msra.mxu0 0.0
    %1748 = vmatprep.subr.mxu0 0.0
    %1749 = vmatpush2.xpose.msra.mxu0 0.0
    %1750 = vmatprep.subr.mxu0 0.0
    %1751 = vmatpush2.xpose.msra.mxu0 0.0
    %1752 = vmatprep.subr.mxu0 0.0
    %1753 = vmatpush2.xpose.msra.mxu0 0.0
    %1754 = vmatprep.subr.mxu0 0.0
    %1755 = vmatpush2.xpose.msra.mxu0 0.0
    %1756 = vmatprep.subr.mxu0 0.0
    %1757 = vmatpush2.xpose.msra.mxu0 0.0
    %1758 = vmatprep.subr.mxu0 0.0
    %1759 = vmatpush2.xpose.msra.mxu0 0.0
    %1760 = vmatprep.subr.mxu0 0.0
    %1761 = vmatpush2.xpose.msra.mxu0 0.0
    %1762 = vmatprep.subr.mxu0 0.0
    %1763 = vmatpush2.xpose.msra.mxu0 0.0
    %1764 = vmatprep.subr.mxu0 0.0
    %1765 = vmatpush2.xpose.msra.mxu0 0.0
    %1766 = vmatprep.subr.mxu0 0.0
    %1767 = vmatpush2.xpose.msra.mxu0 0.0
    %1768 = vmatprep.subr.mxu0 0.0
    %1769 = vmatpush2.xpose.msra.mxu0 0.0
    %1770 = vmatprep.mubr.f32.mxu0 0.0
    %1771 = vmatmul.mubr.f32.gmra.mxu0 %v1698
    %v1772 = vpop.f32.mrf.mxu0
    %v1773 = vadd.f32 0.0, %v1772
    %v1774 = vpop.f32.mrf.mxu0
    %1775 = vmatprep.mubr.f32.mxu0 0.0
    %1776 = vmatmul.mubr.f32.gmra.mxu0 %v1700
    %v1777 = vpop.f32.mrf.mxu0
    %v1778 = vadd.f32 0.0, %v1777
    %v1779 = vpop.f32.mrf.mxu0
    %1780 = vdwg.mxu0
    %1781 = vrot.lane.b32.xlu0 %v288, 80
    %v1782 = vpop.permute.xlu0 %1781
    %1783 = vrot.lane.b32.xlu0 %v292, 80
    %v1784 = vpop.permute.xlu0 %1783
    %1785 = vrot.lane.b32.xlu0 %v288, 16
    %v1786 = vpop.permute.xlu0 %1785
    %1787 = vrot.lane.b32.xlu0 %v292, 16
    %v1788 = vpop.permute.xlu0 %1787
    %v1789 = vsel %vm302, %v1782, 0
    %v1791 = vsel %vm302, %v1784, 0
    %v1793 = vsel %vm302, %v1786, 0
    %v1795 = vsel %vm302, %v1788, 0
    %1797 = vmatprep.subr.mxu0 0.0
    %1798 = vmatpush1.xpose.msra.mxu0 0.0
    %1799 = vmatprep.subr.mxu0 0.0
    %1800 = vmatpush1.xpose.msra.mxu0 0.0
    %1801 = vmatprep.subr.mxu0 0.0
    %1802 = vmatpush1.xpose.msra.mxu0 0.0
    %1803 = vmatprep.subr.mxu0 0.0
    %1804 = vmatpush1.xpose.msra.mxu0 0.0
    %1805 = vmatprep.subr.mxu0 0.0
    %1806 = vmatpush1.xpose.msra.mxu0 0.0
    %1807 = vmatprep.subr.mxu0 0.0
    %1808 = vmatpush1.xpose.msra.mxu0 0.0
    %1809 = vmatprep.subr.mxu0 0.0
    %1810 = vmatpush1.xpose.msra.mxu0 0.0
    %1811 = vmatprep.subr.mxu0 0.0
    %1812 = vmatpush1.xpose.msra.mxu0 0.0
    %1813 = vmatprep.subr.mxu0 0.0
    %1814 = vmatpush1.xpose.msra.mxu0 0.0
    %1815 = vmatprep.subr.mxu0 0.0
    %1816 = vmatpush1.xpose.msra.mxu0 0.0
    %1817 = vmatprep.subr.mxu0 0.0
    %1818 = vmatpush1.xpose.msra.mxu0 0.0
    %1819 = vmatprep.subr.mxu0 0.0
    %1820 = vmatpush1.xpose.msra.mxu0 0.0
    %1821 = vmatprep.subr.mxu0 0.0
    %1822 = vmatpush1.xpose.msra.mxu0 0.0
    %1823 = vmatprep.subr.mxu0 0.0
    %1824 = vmatpush1.xpose.msra.mxu0 0.0
    %1825 = vmatprep.subr.mxu0 0.0
    %1826 = vmatpush1.xpose.msra.mxu0 %v1795
    %1827 = vmatprep.subr.mxu0 0.0
    %1828 = vmatpush1.xpose.msra.mxu0 %v1793
    %1829 = vmatprep.subr.mxu0 0.0
    %1830 = vmatpush2.xpose.msra.mxu0 0.0
    %1831 = vmatprep.subr.mxu0 0.0
    %1832 = vmatpush2.xpose.msra.mxu0 0.0
    %1833 = vmatprep.subr.mxu0 0.0
    %1834 = vmatpush2.xpose.msra.mxu0 0.0
    %1835 = vmatprep.subr.mxu0 0.0
    %1836 = vmatpush2.xpose.msra.mxu0 0.0
    %1837 = vmatprep.subr.mxu0 0.0
    %1838 = vmatpush2.xpose.msra.mxu0 0.0
    %1839 = vmatprep.subr.mxu0 0.0
    %1840 = vmatpush2.xpose.msra.mxu0 0.0
    %1841 = vmatprep.subr.mxu0 0.0
    %1842 = vmatpush2.xpose.msra.mxu0 0.0
    %1843 = vmatprep.subr.mxu0 0.0
    %1844 = vmatpush2.xpose.msra.mxu0 0.0
    %1845 = vmatprep.subr.mxu0 0.0
    %1846 = vmatpush2.xpose.msra.mxu0 0.0
    %1847 = vmatprep.subr.mxu0 0.0
    %1848 = vmatpush2.xpose.msra.mxu0 0.0
    %1849 = vmatprep.subr.mxu0 0.0
    %1850 = vmatpush2.xpose.msra.mxu0 0.0
    %1851 = vmatprep.subr.mxu0 0.0
    %1852 = vmatpush2.xpose.msra.mxu0 0.0
    %1853 = vmatprep.subr.mxu0 0.0
    %1854 = vmatpush2.xpose.msra.mxu0 0.0
    %1855 = vmatprep.subr.mxu0 0.0
    %1856 = vmatpush2.xpose.msra.mxu0 0.0
    %1857 = vmatprep.subr.mxu0 0.0
    %1858 = vmatpush2.xpose.msra.mxu0 0.0
    %1859 = vmatprep.subr.mxu0 0.0
    %1860 = vmatpush2.xpose.msra.mxu0 0.0
    %1861 = vmatprep.mubr.f32.mxu0 0.0
    %1862 = vmatmul.mubr.f32.gmra.mxu0 %v1789
    %v1863 = vpop.f32.mrf.mxu0
    %v1864 = vadd.f32 0.0, %v1863
    %v1865 = vpop.f32.mrf.mxu0
    %1866 = vmatprep.mubr.f32.mxu0 0.0
    %1867 = vmatmul.mubr.f32.gmra.mxu0 %v1791
    %v1868 = vpop.f32.mrf.mxu0
    %v1869 = vadd.f32 0.0, %v1868
    %v1870 = vpop.f32.mrf.mxu0
    %1871 = vdwg.mxu0
    %v1872 = vmul.f32 %v1773, 0.25
    %v1873 = vmul.f32 %v1778, 0.25
    %v1874 = vmul.f32 %v1864, 0.25
    %v1875 = vmul.f32 %v1869, 0.25
    %v1876 = vsel %vm302, %v1872, -inf
    %1877 = vmax.xlane.f32.xlu0 %v1876
    %v1878 = vpop.xlane.xlu0 %1877
    %v1879 = vsel %vm302, %v1873, -inf
    %1880 = vmax.xlane.f32.xlu0 %v1879
    %v1881 = vpop.xlane.xlu0 %1880
    %v1882 = vsel %vm302, %v1874, -inf
    %1883 = vmax.xlane.f32.xlu0 %v1882
    %v1884 = vpop.xlane.xlu0 %1883
    %v1885 = vsel %vm302, %v1875, -inf
    %1886 = vmax.xlane.f32.xlu0 %v1885
    %v1887 = vpop.xlane.xlu0 %1886
    %v1888 = vsub.f32 %v1872, %v1878
    %v1889 = vsub.f32 %v1873, %v1881
    %v1890 = vsub.f32 %v1874, %v1884
    %v1891 = vsub.f32 %v1875, %v1887
    %v1892 = vmul.f32 %v1888, 1.442695
    %v1893 = vpow.pop %v1892
    %v1894 = vmul.f32 %v1889, 1.442695
    %v1895 = vpow.pop %v1894
    %v1896 = vmul.f32 %v1890, 1.442695
    %v1897 = vpow.pop %v1896
    %v1898 = vmul.f32 %v1891, 1.442695
    %v1899 = vpow.pop %v1898
    %v1900 = vsel %vm302, %v1893, 0.0
    %1901 = vadd.xlane.f32.xlu0 %v1900
    %v1902 = vpop.xlane.xlu0 %1901
    %v1903 = vsel %vm302, %v1895, 0.0
    %1904 = vadd.xlane.f32.xlu0 %v1903
    %v1905 = vpop.xlane.xlu0 %1904
    %v1906 = vsel %vm302, %v1897, 0.0
    %1907 = vadd.xlane.f32.xlu0 %v1906
    %v1908 = vpop.xlane.xlu0 %1907
    %v1909 = vsel %vm302, %v1899, 0.0
    %1910 = vadd.xlane.f32.xlu0 %v1909
    %v1911 = vpop.xlane.xlu0 %1910
    %v1912 = vrcp.pop %v1902
    %v1913 = vrcp.pop %v1905
    %v1914 = vrcp.pop %v1908
    %v1915 = vrcp.pop %v1911
    %v1916 = vmul.f32 %v1893, %v1912
    %v1917 = vmul.f32 %v1895, %v1913
    %v1918 = vmul.f32 %v1897, %v1914
    %v1919 = vmul.f32 %v1899, %v1915
    %1920 = vrot.lane.b32.xlu0 %v280, 80
    %v1921 = vpop.permute.xlu0 %1920
    %1922 = vrot.lane.b32.xlu0 %v284, 80
    %v1923 = vpop.permute.xlu0 %1922
    %v1927 = vsel %vm302, %v1916, 0
    %v1930 = vsel %vm302, %v1917, 0
    %1932 = vmatprep.subr.mxu0 0.0
    %1933 = vmatpush1.msra.mxu0 0.0
    %1934 = vmatprep.subr.mxu0 0.0
    %1935 = vmatpush1.msra.mxu0 0.0
    %1936 = vmatprep.subr.mxu0 0.0
    %1937 = vmatpush1.msra.mxu0 0.0
    %1938 = vmatprep.subr.mxu0 0.0
    %1939 = vmatpush1.msra.mxu0 0.0
    %1940 = vmatprep.subr.mxu0 0.0
    %1941 = vmatpush1.msra.mxu0 0.0
    %1942 = vmatprep.subr.mxu0 0.0
    %1943 = vmatpush1.msra.mxu0 0.0
    %1944 = vmatprep.subr.mxu0 0.0
    %1945 = vmatpush1.msra.mxu0 0.0
    %1946 = vmatprep.subr.mxu0 0.0
    %1947 = vmatpush1.msra.mxu0 0.0
    %1948 = vmatprep.subr.mxu0 0.0
    %1949 = vmatpush1.msra.mxu0 0.0
    %1950 = vmatprep.subr.mxu0 0.0
    %1951 = vmatpush1.msra.mxu0 0.0
    %1952 = vmatprep.subr.mxu0 0.0
    %1953 = vmatpush1.msra.mxu0 0.0
    %1954 = vmatprep.subr.mxu0 0.0
    %1955 = vmatpush1.msra.mxu0 0.0
    %1956 = vmatprep.subr.mxu0 0.0
    %1957 = vmatpush1.msra.mxu0 0.0
    %1958 = vmatprep.subr.mxu0 0.0
    %1959 = vmatpush1.msra.mxu0 0.0
    %1960 = vmatprep.subr.mxu0 0.0
    %1961 = vmatpush1.msra.mxu0 %v1923
    %1962 = vmatprep.subr.mxu0 0.0
    %1963 = vmatpush1.msra.mxu0 %v1921
    %1964 = vmatprep.subr.mxu0 0.0
    %1965 = vmatpush2.msra.mxu0 0.0
    %1966 = vmatprep.subr.mxu0 0.0
    %1967 = vmatpush2.msra.mxu0 0.0
    %1968 = vmatprep.subr.mxu0 0.0
    %1969 = vmatpush2.msra.mxu0 0.0
    %1970 = vmatprep.subr.mxu0 0.0
    %1971 = vmatpush2.msra.mxu0 0.0
    %1972 = vmatprep.subr.mxu0 0.0
    %1973 = vmatpush2.msra.mxu0 0.0
    %1974 = vmatprep.subr.mxu0 0.0
    %1975 = vmatpush2.msra.mxu0 0.0
    %1976 = vmatprep.subr.mxu0 0.0
    %1977 = vmatpush2.msra.mxu0 0.0
    %1978 = vmatprep.subr.mxu0 0.0
    %1979 = vmatpush2.msra.mxu0 0.0
    %1980 = vmatprep.subr.mxu0 0.0
    %1981 = vmatpush2.msra.mxu0 0.0
    %1982 = vmatprep.subr.mxu0 0.0
    %1983 = vmatpush2.msra.mxu0 0.0
    %1984 = vmatprep.subr.mxu0 0.0
    %1985 = vmatpush2.msra.mxu0 0.0
    %1986 = vmatprep.subr.mxu0 0.0
    %1987 = vmatpush2.msra.mxu0 0.0
    %1988 = vmatprep.subr.mxu0 0.0
    %1989 = vmatpush2.msra.mxu0 0.0
    %1990 = vmatprep.subr.mxu0 0.0
    %1991 = vmatpush2.msra.mxu0 0.0
    %1992 = vmatprep.subr.mxu0 0.0
    %1993 = vmatpush2.msra.mxu0 0.0
    %1994 = vmatprep.subr.mxu0 0.0
    %1995 = vmatpush2.msra.mxu0 0.0
    %1996 = vmatprep.mubr.f32.mxu0 0.0
    %1997 = vmatmul.mubr.f32.gmra.mxu0 %v1927
    %v1998 = vpop.f32.mrf.mxu0
    %v1999 = vadd.f32 0.0, %v1998
    %v2000 = vpop.f32.mrf.mxu0
    %2001 = vmatprep.mubr.f32.mxu0 0.0
    %2002 = vmatmul.mubr.f32.gmra.mxu0 %v1930
    %v2003 = vpop.f32.mrf.mxu0
    %v2004 = vadd.f32 0.0, %v2003
    %v2005 = vpop.f32.mrf.mxu0
    %2006 = vdwg.mxu0
    %2007 = vrot.lane.b32.xlu0 %v290, 80
    %v2008 = vpop.permute.xlu0 %2007
    %2009 = vrot.lane.b32.xlu0 %v294, 80
    %v2010 = vpop.permute.xlu0 %2009
    %v2014 = vsel %vm302, %v1918, 0
    %v2017 = vsel %vm302, %v1919, 0
    %2019 = vmatprep.subr.mxu0 0.0
    %2020 = vmatpush1.msra.mxu0 0.0
    %2021 = vmatprep.subr.mxu0 0.0
    %2022 = vmatpush1.msra.mxu0 0.0
    %2023 = vmatprep.subr.mxu0 0.0
    %2024 = vmatpush1.msra.mxu0 0.0
    %2025 = vmatprep.subr.mxu0 0.0
    %2026 = vmatpush1.msra.mxu0 0.0
    %2027 = vmatprep.subr.mxu0 0.0
    %2028 = vmatpush1.msra.mxu0 0.0
    %2029 = vmatprep.subr.mxu0 0.0
    %2030 = vmatpush1.msra.mxu0 0.0
    %2031 = vmatprep.subr.mxu0 0.0
    %2032 = vmatpush1.msra.mxu0 0.0
    %2033 = vmatprep.subr.mxu0 0.0
    %2034 = vmatpush1.msra.mxu0 0.0
    %2035 = vmatprep.subr.mxu0 0.0
    %2036 = vmatpush1.msra.mxu0 0.0
    %2037 = vmatprep.subr.mxu0 0.0
    %2038 = vmatpush1.msra.mxu0 0.0
    %2039 = vmatprep.subr.mxu0 0.0
    %2040 = vmatpush1.msra.mxu0 0.0
    %2041 = vmatprep.subr.mxu0 0.0
    %2042 = vmatpush1.msra.mxu0 0.0
    %2043 = vmatprep.subr.mxu0 0.0
    %2044 = vmatpush1.msra.mxu0 0.0
    %2045 = vmatprep.subr.mxu0 0.0
    %2046 = vmatpush1.msra.mxu0 0.0
    %2047 = vmatprep.subr.mxu0 0.0
    %2048 = vmatpush1.msra.mxu0 %v2010
    %2049 = vmatprep.subr.mxu0 0.0
    %2050 = vmatpush1.msra.mxu0 %v2008
    %2051 = vmatprep.subr.mxu0 0.0
    %2052 = vmatpush2.msra.mxu0 0.0
    %2053 = vmatprep.subr.mxu0 0.0
    %2054 = vmatpush2.msra.mxu0 0.0
    %2055 = vmatprep.subr.mxu0 0.0
    %2056 = vmatpush2.msra.mxu0 0.0
    %2057 = vmatprep.subr.mxu0 0.0
    %2058 = vmatpush2.msra.mxu0 0.0
    %2059 = vmatprep.subr.mxu0 0.0
    %2060 = vmatpush2.msra.mxu0 0.0
    %2061 = vmatprep.subr.mxu0 0.0
    %2062 = vmatpush2.msra.mxu0 0.0
    %2063 = vmatprep.subr.mxu0 0.0
    %2064 = vmatpush2.msra.mxu0 0.0
    %2065 = vmatprep.subr.mxu0 0.0
    %2066 = vmatpush2.msra.mxu0 0.0
    %2067 = vmatprep.subr.mxu0 0.0
    %2068 = vmatpush2.msra.mxu0 0.0
    %2069 = vmatprep.subr.mxu0 0.0
    %2070 = vmatpush2.msra.mxu0 0.0
    %2071 = vmatprep.subr.mxu0 0.0
    %2072 = vmatpush2.msra.mxu0 0.0
    %2073 = vmatprep.subr.mxu0 0.0
    %2074 = vmatpush2.msra.mxu0 0.0
    %2075 = vmatprep.subr.mxu0 0.0
    %2076 = vmatpush2.msra.mxu0 0.0
    %2077 = vmatprep.subr.mxu0 0.0
    %2078 = vmatpush2.msra.mxu0 0.0
    %2079 = vmatprep.subr.mxu0 0.0
    %2080 = vmatpush2.msra.mxu0 0.0
    %2081 = vmatprep.subr.mxu0 0.0
    %2082 = vmatpush2.msra.mxu0 0.0
    %2083 = vmatprep.mubr.f32.mxu0 0.0
    %2084 = vmatmul.mubr.f32.gmra.mxu0 %v2014
    %v2085 = vpop.f32.mrf.mxu0
    %v2086 = vadd.f32 0.0, %v2085
    %v2087 = vpop.f32.mrf.mxu0
    %2088 = vmatprep.mubr.f32.mxu0 0.0
    %2089 = vmatmul.mubr.f32.gmra.mxu0 %v2017
    %v2090 = vpop.f32.mrf.mxu0
    %v2091 = vadd.f32 0.0, %v2090
    %v2092 = vpop.f32.mrf.mxu0
    %2093 = vdwg.mxu0
    %v2094 = vpack.c.bf16 %v2004, %v1999
    %v2095 = vpack.c.bf16 %v2091, %v2086
    %v2098 = vunpack.c.l.b16 %v69
    %v2099 = vunpack.c.l.b16 %v70
    %v2100 = vpack.c.b16 %v2099, %v2098
    %v2103 = vsel %vm302, %v2094, 0
    %v2106 = vsel %vm302, %v2095, 0
    %2108 = vmatprep.subr.bf16.mxu0 0
    %2109 = vmatpush1.bf16.msra.mxu0 0
    %2110 = vmatprep.subr.bf16.mxu0 0
    %2111 = vmatpush1.bf16.msra.mxu0 0
    %2112 = vmatprep.subr.bf16.mxu0 0
    %2113 = vmatpush1.bf16.msra.mxu0 0
    %2114 = vmatprep.subr.bf16.mxu0 0
    %2115 = vmatpush1.bf16.msra.mxu0 0
    %2116 = vmatprep.subr.bf16.mxu0 0
    %2117 = vmatpush1.bf16.msra.mxu0 0
    %2118 = vmatprep.subr.bf16.mxu0 0
    %2119 = vmatpush1.bf16.msra.mxu0 0
    %2120 = vmatprep.subr.bf16.mxu0 0
    %2121 = vmatpush1.bf16.msra.mxu0 0
    %2122 = vmatprep.subr.bf16.mxu0 0
    %2123 = vmatpush1.bf16.msra.mxu0 %v2100
    %2124 = vmatprep.subr.bf16.mxu0 0
    %2125 = vmatpush2.bf16.msra.mxu0 0
    %2126 = vmatprep.subr.bf16.mxu0 0
    %2127 = vmatpush2.bf16.msra.mxu0 0
    %2128 = vmatprep.subr.bf16.mxu0 0
    %2129 = vmatpush2.bf16.msra.mxu0 0
    %2130 = vmatprep.subr.bf16.mxu0 0
    %2131 = vmatpush2.bf16.msra.mxu0 0
    %2132 = vmatprep.subr.bf16.mxu0 0
    %2133 = vmatpush2.bf16.msra.mxu0 0
    %2134 = vmatprep.subr.bf16.mxu0 0
    %2135 = vmatpush2.bf16.msra.mxu0 0
    %2136 = vmatprep.subr.bf16.mxu0 0
    %2137 = vmatpush2.bf16.msra.mxu0 0
    %2138 = vmatprep.subr.bf16.mxu0 0
    %2139 = vmatpush2.bf16.msra.mxu0 0
    %2140 = vmatprep.mubr.bf16.mxu0 0
    %2141 = vmatmul.mubr.bf16.gmra.mxu0 %v2103
    %v2142 = vpop.f32.mrf.mxu0
    %v2143 = vadd.f32 0.0, %v2142
    %v2144 = vpop.f32.mrf.mxu0
    %v2145 = vpop.f32.mrf.mxu0
    %v2146 = vadd.f32 0.0, %v2145
    %v2147 = vpop.f32.mrf.mxu0
    %2148 = vmatprep.mubr.bf16.mxu0 0
    %2149 = vmatmul.mubr.bf16.gmra.mxu0 %v2106
    %v2150 = vpop.f32.mrf.mxu0
    %v2151 = vadd.f32 0.0, %v2150
    %v2152 = vpop.f32.mrf.mxu0
    %v2153 = vpop.f32.mrf.mxu0
    %v2154 = vadd.f32 0.0, %v2153
    %v2155 = vpop.f32.mrf.mxu0
    %2156 = vdwg.mxu0
    %v2157 = vadd.f32 %v1686, %v2143
    %v2158 = vadd.f32 %v1687, %v2146
    %v2159 = vadd.f32 %v1688, %v2151
    %v2160 = vadd.f32 %v1689, %v2154
    %v2161 = vadd.f32 %v46, %v2157
    %v2162 = vadd.f32 %v47, %v2158
    %v2163 = vadd.f32 %v48, %v2159
    %v2164 = vadd.f32 %v49, %v2160
    %v2166 = vlaneseq
    %v2167 = vshrl.u32 %v2166, 7
    %v2168 = vsub.s32 0, %v2167
    %v2169 = vrot.slane %v71, %v2168
    %v2171 = vadd.f32 %v2161, %v2169
    %v2172 = vadd.f32 %v2162, %v2169
    %v2173 = vadd.f32 %v2163, %v2169
    %v2174 = vadd.f32 %v2164, %v2169
    %v2175 = vpack.c.bf16 %v2172, %v2171
    %v2176 = vpack.c.bf16 %v2174, %v2173
    %v2185 = vunpack.c.l.b16 %v72
    %v2186 = vunpack.c.l.b16 %v73
    %v2187 = vunpack.c.l.b16 %v74
    %v2188 = vunpack.c.l.b16 %v75
    %v2189 = vunpack.c.l.b16 %v76
    %v2190 = vunpack.c.l.b16 %v77
    %v2191 = vunpack.c.l.b16 %v78
    %v2192 = vunpack.c.l.b16 %v79
    %v2193 = vpack.c.b16 %v2186, %v2185
    %v2194 = vpack.c.b16 %v2188, %v2187
    %v2195 = vpack.c.b16 %v2190, %v2189
    %v2196 = vpack.c.b16 %v2192, %v2191
    %v2202 = vsel %vm110, %v2175, 0
    %v2205 = vsel %vm110, %v2176, 0
    %2207 = vmatprep.subr.bf16.mxu0 0
    %2208 = vmatpush1.bf16.msra.mxu0 0
    %2209 = vmatprep.subr.bf16.mxu0 0
    %2210 = vmatpush1.bf16.msra.mxu0 0
    %2211 = vmatprep.subr.bf16.mxu0 0
    %2212 = vmatpush1.bf16.msra.mxu0 0
    %2213 = vmatprep.subr.bf16.mxu0 0
    %2214 = vmatpush1.bf16.msra.mxu0 0
    %2215 = vmatprep.subr.bf16.mxu0 0
    %2216 = vmatpush1.bf16.msra.mxu0 %v2196
    %2217 = vmatprep.subr.bf16.mxu0 0
    %2218 = vmatpush1.bf16.msra.mxu0 %v2195
    %2219 = vmatprep.subr.bf16.mxu0 0
    %2220 = vmatpush1.bf16.msra.mxu0 %v2194
    %2221 = vmatprep.subr.bf16.mxu0 0
    %2222 = vmatpush1.bf16.msra.mxu0 %v2193
    %2223 = vmatprep.subr.bf16.mxu0 0
    %2224 = vmatpush2.bf16.msra.mxu0 0
    %2225 = vmatprep.subr.bf16.mxu0 0
    %2226 = vmatpush2.bf16.msra.mxu0 0
    %2227 = vmatprep.subr.bf16.mxu0 0
    %2228 = vmatpush2.bf16.msra.mxu0 0
    %2229 = vmatprep.subr.bf16.mxu0 0
    %2230 = vmatpush2.bf16.msra.mxu0 0
    %2231 = vmatprep.subr.bf16.mxu0 0
    %2232 = vmatpush2.bf16.msra.mxu0 0
    %2233 = vmatprep.subr.bf16.mxu0 0
    %2234 = vmatpush2.bf16.msra.mxu0 0
    %2235 = vmatprep.subr.bf16.mxu0 0
    %2236 = vmatpush2.bf16.msra.mxu0 0
    %2237 = vmatprep.subr.bf16.mxu0 0
    %2238 = vmatpush2.bf16.msra.mxu0 0
    %2239 = vmatprep.mubr.bf16.mxu0 0
    %2240 = vmatmul.mubr.bf16.gmra.mxu0 %v2202
    %v2241 = vpop.f32.mrf.mxu0
    %v2242 = vadd.f32 %v101, %v2241
    %v2243 = vpop.f32.mrf.mxu0
    %v2244 = vpop.f32.mrf.mxu0
    %v2245 = vadd.f32 %v101, %v2244
    %v2246 = vpop.f32.mrf.mxu0
    %2247 = vmatprep.mubr.bf16.mxu0 0
    %2248 = vmatmul.mubr.bf16.gmra.mxu0 %v2205
    %v2249 = vpop.f32.mrf.mxu0
    %v2250 = vadd.f32 %v101, %v2249
    %v2251 = vpop.f32.mrf.mxu0
    %v2252 = vpop.f32.mrf.mxu0
    %v2253 = vadd.f32 %v101, %v2252
    %v2254 = vpop.f32.mrf.mxu0
    %2255 = vdwg.mxu0
    %v2256 = vmul.f32 %v2242, %v2242
    %v2257 = vmul.f32 %v2245, %v2245
    %v2258 = vmul.f32 %v2250, %v2250
    %v2259 = vmul.f32 %v2253, %v2253
    %v2260 = vmul.f32 %v2242, %v2256
    %v2261 = vmul.f32 %v2245, %v2257
    %v2262 = vmul.f32 %v2250, %v2258
    %v2263 = vmul.f32 %v2253, %v2259
    %v2264 = vmul.f32 %v2260, 0.044715
    %v2265 = vmul.f32 %v2261, 0.044715
    %v2266 = vmul.f32 %v2262, 0.044715
    %v2267 = vmul.f32 %v2263, 0.044715
    %v2268 = vadd.f32 %v2242, %v2264
    %v2269 = vadd.f32 %v2245, %v2265
    %v2270 = vadd.f32 %v2250, %v2266
    %v2271 = vadd.f32 %v2253, %v2267
    %v2272 = vmul.f32 %v2268, 0.7978846
    %v2273 = vmul.f32 %v2269, 0.7978846
    %v2274 = vmul.f32 %v2270, 0.7978846
    %v2275 = vmul.f32 %v2271, 0.7978846
    %v2276 = vtanh.pop %v2272
    %v2277 = vtanh.pop %v2273
    %v2278 = vtanh.pop %v2274
    %v2279 = vtanh.pop %v2275
    %v2280 = vadd.f32 %v2276, 1.0
    %v2281 = vadd.f32 %v2277, 1.0
    %v2282 = vadd.f32 %v2278, 1.0
    %v2283 = vadd.f32 %v2279, 1.0
    %v2284 = vmul.f32 %v2280, 0.5
    %v2285 = vmul.f32 %v2281, 0.5
    %v2286 = vmul.f32 %v2282, 0.5
    %v2287 = vmul.f32 %v2283, 0.5
    %v2288 = vmul.f32 %v2242, %v2284
    %v2289 = vmul.f32 %v2245, %v2285
    %v2290 = vmul.f32 %v2250, %v2286
    %v2291 = vmul.f32 %v2253, %v2287
    %v2292 = vpack.c.bf16 %v2289, %v2288
    %v2293 = vpack.c.bf16 %v2291, %v2290
    %v2310 = vunpack.c.l.b16 %v80
    %v2311 = vunpack.c.l.b16 %v81
    %v2312 = vunpack.c.l.b16 %v82
    %v2313 = vunpack.c.l.b16 %v83
    %v2314 = vunpack.c.l.b16 %v84
    %v2315 = vunpack.c.l.b16 %v85
    %v2316 = vunpack.c.l.b16 %v86
    %v2317 = vunpack.c.l.b16 %v87
    %v2318 = vunpack.c.l.b16 %v88
    %v2319 = vunpack.c.l.b16 %v89
    %v2320 = vunpack.c.l.b16 %v90
    %v2321 = vunpack.c.l.b16 %v91
    %v2322 = vunpack.c.l.b16 %v92
    %v2323 = vunpack.c.l.b16 %v93
    %v2324 = vunpack.c.l.b16 %v94
    %v2325 = vunpack.c.l.b16 %v95
    %v2326 = vpack.c.b16 %v2311, %v2310
    %v2327 = vpack.c.b16 %v2313, %v2312
    %v2328 = vpack.c.b16 %v2315, %v2314
    %v2329 = vpack.c.b16 %v2317, %v2316
    %v2330 = vpack.c.b16 %v2319, %v2318
    %v2331 = vpack.c.b16 %v2321, %v2320
    %v2332 = vpack.c.b16 %v2323, %v2322
    %v2333 = vpack.c.b16 %v2325, %v2324
    %2342 = vmatprep.subr.bf16.mxu0 0
    %2343 = vmatpush1.bf16.msra.mxu0 %v2333
    %2344 = vmatprep.subr.bf16.mxu0 0
    %2345 = vmatpush1.bf16.msra.mxu0 %v2332
    %2346 = vmatprep.subr.bf16.mxu0 0
    %2347 = vmatpush1.bf16.msra.mxu0 %v2331
    %2348 = vmatprep.subr.bf16.mxu0 0
    %2349 = vmatpush1.bf16.msra.mxu0 %v2330
    %2350 = vmatprep.subr.bf16.mxu0 0
    %2351 = vmatpush1.bf16.msra.mxu0 %v2329
    %2352 = vmatprep.subr.bf16.mxu0 0
    %2353 = vmatpush1.bf16.msra.mxu0 %v2328
    %2354 = vmatprep.subr.bf16.mxu0 0
    %2355 = vmatpush1.bf16.msra.mxu0 %v2327
    %2356 = vmatprep.subr.bf16.mxu0 0
    %2357 = vmatpush1.bf16.msra.mxu0 %v2326
    %2358 = vmatprep.subr.bf16.mxu0 0
    %2359 = vmatpush2.bf16.msra.mxu0 0
    %2360 = vmatprep.subr.bf16.mxu0 0
    %2361 = vmatpush2.bf16.msra.mxu0 0
    %2362 = vmatprep.subr.bf16.mxu0 0
    %2363 = vmatpush2.bf16.msra.mxu0 0
    %2364 = vmatprep.subr.bf16.mxu0 0
    %2365 = vmatpush2.bf16.msra.mxu0 0
    %2366 = vmatprep.subr.bf16.mxu0 0
    %2367 = vmatpush2.bf16.msra.mxu0 0
    %2368 = vmatprep.subr.bf16.mxu0 0
    %2369 = vmatpush2.bf16.msra.mxu0 0
    %2370 = vmatprep.subr.bf16.mxu0 0
    %2371 = vmatpush2.bf16.msra.mxu0 0
    %2372 = vmatprep.subr.bf16.mxu0 0
    %2373 = vmatpush2.bf16.msra.mxu0 0
    %2374 = vmatprep.mubr.bf16.mxu0 0
    %2375 = vmatmul.mubr.bf16.gmra.mxu0 %v2292
    %v2376 = vpop.f32.mrf.mxu0
    %v2377 = vadd.f32 %v108, %v2376
    %v2378 = vpop.f32.mrf.mxu0
    %v2379 = vpop.f32.mrf.mxu0
    %v2380 = vadd.f32 %v108, %v2379
    %v2381 = vpop.f32.mrf.mxu0
    %2382 = vmatprep.mubr.bf16.mxu0 0
    %2383 = vmatmul.mubr.bf16.gmra.mxu0 %v2293
    %v2384 = vpop.f32.mrf.mxu0
    %v2385 = vadd.f32 %v108, %v2384
    %v2386 = vpop.f32.mrf.mxu0
    %v2387 = vpop.f32.mrf.mxu0
    %v2388 = vadd.f32 %v108, %v2387
    %v2389 = vpop.f32.mrf.mxu0
    %2390 = vdwg.mxu0
    %v2391 = vsel %vm110, %v2377, 0.0
    %2392 = vadd.xlane.f32.xlu0 %v2391
    %v2393 = vpop.xlane.xlu0 %2392
    %v2394 = vsel %vm110, %v2380, 0.0
    %2395 = vadd.xlane.f32.xlu0 %v2394
    %v2396 = vpop.xlane.xlu0 %2395
    %v2397 = vsel %vm110, %v2385, 0.0
    %2398 = vadd.xlane.f32.xlu0 %v2397
    %v2399 = vpop.xlane.xlu0 %2398
    %v2400 = vsel %vm110, %v2388, 0.0
    %2401 = vadd.xlane.f32.xlu0 %v2400
    %v2402 = vpop.xlane.xlu0 %2401
    %v2403 = vmul.f32 %v2393, %v123
    %v2404 = vmul.f32 %v2396, %v123
    %v2405 = vmul.f32 %v2399, %v123
    %v2406 = vmul.f32 %v2402, %v123
    %v2407 = vsub.f32 %v2377, %v2403
    %v2408 = vsub.f32 %v2380, %v2404
    %v2409 = vsub.f32 %v2385, %v2405
    %v2410 = vsub.f32 %v2388, %v2406
    %v2411 = vmul.f32 %v2407, %v2407
    %v2412 = vmul.f32 %v2408, %v2408
    %v2413 = vmul.f32 %v2409, %v2409
    %v2414 = vmul.f32 %v2410, %v2410
    %v2415 = vsel %vm110, %v2411, 0.0
    %2416 = vadd.xlane.f32.xlu0 %v2415
    %v2417 = vpop.xlane.xlu0 %2416
    %v2418 = vsel %vm110, %v2412, 0.0
    %2419 = vadd.xlane.f32.xlu0 %v2418
    %v2420 = vpop.xlane.xlu0 %2419
    %v2421 = vsel %vm110, %v2413, 0.0
    %2422 = vadd.xlane.f32.xlu0 %v2421
    %v2423 = vpop.xlane.xlu0 %2422
    %v2424 = vsel %vm110, %v2414, 0.0
    %2425 = vadd.xlane.f32.xlu0 %v2424
    %v2426 = vpop.xlane.xlu0 %2425
    %v2427 = vmul.f32 %v2417, %v123
    %v2428 = vmul.f32 %v2420, %v123
    %v2429 = vmul.f32 %v2423, %v123
    %v2430 = vmul.f32 %v2426, %v123
    %v2431 = vadd.f32 %v2427, 1e-06
    %v2432 = vadd.f32 %v2428, 1e-06
    %v2433 = vadd.f32 %v2429, 1e-06
    %v2434 = vadd.f32 %v2430, 1e-06
    %v2435 = vrsqrt.pop %v2431
    %v2436 = vrsqrt.pop %v2432
    %v2437 = vrsqrt.pop %v2433
    %v2438 = vrsqrt.pop %v2434
    %v2439 = vmul.f32 %v2407, %v2435
    %v2440 = vmul.f32 %v2408, %v2436
    %v2441 = vmul.f32 %v2409, %v2437
    %v2442 = vmul.f32 %v2410, %v2438
    %v2444 = vlaneseq
    %v2445 = vshrl.u32 %v2444, 7
    %v2446 = vsub.s32 0, %v2445
    %v2447 = vrot.slane %v52, %v2446
    %v2449 = vmul.f32 %v2439, %v2447
    %v2450 = vmul.f32 %v2440, %v2447
    %v2451 = vmul.f32 %v2441, %v2447
    %v2452 = vmul.f32 %v2442, %v2447
    %v2454 = vlaneseq
    %v2455 = vshrl.u32 %v2454, 7
    %v2456 = vsub.s32 0, %v2455
    %v2457 = vrot.slane %v53, %v2456
    %v2459 = vadd.f32 %v2449, %v2457
    %v2460 = vadd.f32 %v2450, %v2457
    %v2461 = vadd.f32 %v2451, %v2457
    %v2462 = vadd.f32 %v2452, %v2457
    %v2463 = vpack.c.bf16 %v2460, %v2459
    %v2464 = vpack.c.bf16 %v2462, %v2461
    %v2466 = vsel %vm110, %v2463, 0
    %v2469 = vsel %vm110, %v2464, 0
    %2471 = vmatprep.subr.bf16.mxu0 0
    %2472 = vmatpush1.bf16.msra.mxu0 0
    %2473 = vmatprep.subr.bf16.mxu0 0
    %2474 = vmatpush1.bf16.msra.mxu0 0
    %2475 = vmatprep.subr.bf16.mxu0 0
    %2476 = vmatpush1.bf16.msra.mxu0 0
    %2477 = vmatprep.subr.bf16.mxu0 0
    %2478 = vmatpush1.bf16.msra.mxu0 0
    %2479 = vmatprep.subr.bf16.mxu0 0
    %2480 = vmatpush1.bf16.msra.mxu0 %v2196
    %2481 = vmatprep.subr.bf16.mxu0 0
    %2482 = vmatpush1.bf16.msra.mxu0 %v2195
    %2483 = vmatprep.subr.bf16.mxu0 0
    %2484 = vmatpush1.bf16.msra.mxu0 %v2194
    %2485 = vmatprep.subr.bf16.mxu0 0
    %2486 = vmatpush1.bf16.msra.mxu0 %v2193
    %2487 = vmatprep.subr.bf16.mxu0 0
    %2488 = vmatpush2.bf16.msra.mxu0 0
    %2489 = vmatprep.subr.bf16.mxu0 0
    %2490 = vmatpush2.bf16.msra.mxu0 0
    %2491 = vmatprep.subr.bf16.mxu0 0
    %2492 = vmatpush2.bf16.msra.mxu0 0
    %2493 = vmatprep.subr.bf16.mxu0 0
    %2494 = vmatpush2.bf16.msra.mxu0 0
    %2495 = vmatprep.subr.bf16.mxu0 0
    %2496 = vmatpush2.bf16.msra.mxu0 0
    %2497 = vmatprep.subr.bf16.mxu0 0
    %2498 = vmatpush2.bf16.msra.mxu0 0
    %2499 = vmatprep.subr.bf16.mxu0 0
    %2500 = vmatpush2.bf16.msra.mxu0 0
    %2501 = vmatprep.subr.bf16.mxu0 0
    %2502 = vmatpush2.bf16.msra.mxu0 0
    %2503 = vmatprep.mubr.bf16.mxu0 0
    %2504 = vmatmul.mubr.bf16.gmra.mxu0 %v2466
    %v2505 = vpop.f32.mrf.mxu0
    %v2506 = vadd.f32 %v101, %v2505
    %v2507 = vpop.f32.mrf.mxu0
    %v2508 = vpop.f32.mrf.mxu0
    %v2509 = vadd.f32 %v101, %v2508
    %v2510 = vpop.f32.mrf.mxu0
    %2511 = vmatprep.mubr.bf16.mxu0 0
    %2512 = vmatmul.mubr.bf16.gmra.mxu0 %v2469
    %v2513 = vpop.f32.mrf.mxu0
    %v2514 = vadd.f32 %v101, %v2513
    %v2515 = vpop.f32.mrf.mxu0
    %v2516 = vpop.f32.mrf.mxu0
    %v2517 = vadd.f32 %v101, %v2516
    %v2518 = vpop.f32.mrf.mxu0
    %2519 = vdwg.mxu0
    %v2520 = vmul.f32 %v2506, %v2506
    %v2521 = vmul.f32 %v2509, %v2509
    %v2522 = vmul.f32 %v2514, %v2514
    %v2523 = vmul.f32 %v2517, %v2517
    %v2524 = vmul.f32 %v2506, %v2520
    %v2525 = vmul.f32 %v2509, %v2521
    %v2526 = vmul.f32 %v2514, %v2522
    %v2527 = vmul.f32 %v2517, %v2523
    %v2528 = vmul.f32 %v2524, 0.044715
    %v2529 = vmul.f32 %v2525, 0.044715
    %v2530 = vmul.f32 %v2526, 0.044715
    %v2531 = vmul.f32 %v2527, 0.044715
    %v2532 = vadd.f32 %v2506, %v2528
    %v2533 = vadd.f32 %v2509, %v2529
    %v2534 = vadd.f32 %v2514, %v2530
    %v2535 = vadd.f32 %v2517, %v2531
    %v2536 = vmul.f32 %v2532, 0.7978846
    %v2537 = vmul.f32 %v2533, 0.7978846
    %v2538 = vmul.f32 %v2534, 0.7978846
    %v2539 = vmul.f32 %v2535, 0.7978846
    %v2540 = vtanh.pop %v2536
    %v2541 = vtanh.pop %v2537
    %v2542 = vtanh.pop %v2538
    %v2543 = vtanh.pop %v2539
    %v2544 = vadd.f32 %v2540, 1.0
    %v2545 = vadd.f32 %v2541, 1.0
    %v2546 = vadd.f32 %v2542, 1.0
    %v2547 = vadd.f32 %v2543, 1.0
    %v2548 = vmul.f32 %v2544, 0.5
    %v2549 = vmul.f32 %v2545, 0.5
    %v2550 = vmul.f32 %v2546, 0.5
    %v2551 = vmul.f32 %v2547, 0.5
    %v2552 = vmul.f32 %v2506, %v2548
    %v2553 = vmul.f32 %v2509, %v2549
    %v2554 = vmul.f32 %v2514, %v2550
    %v2555 = vmul.f32 %v2517, %v2551
    %v2556 = vpack.c.bf16 %v2553, %v2552
    %v2557 = vpack.c.bf16 %v2555, %v2554
    %2558 = vmatprep.subr.bf16.mxu0 0
    %2559 = vmatpush1.bf16.msra.mxu0 %v2333
    %2560 = vmatprep.subr.bf16.mxu0 0
    %2561 = vmatpush1.bf16.msra.mxu0 %v2332
    %2562 = vmatprep.subr.bf16.mxu0 0
    %2563 = vmatpush1.bf16.msra.mxu0 %v2331
    %2564 = vmatprep.subr.bf16.mxu0 0
    %2565 = vmatpush1.bf16.msra.mxu0 %v2330
    %2566 = vmatprep.subr.bf16.mxu0 0
    %2567 = vmatpush1.bf16.msra.mxu0 %v2329
    %2568 = vmatprep.subr.bf16.mxu0 0
    %2569 = vmatpush1.bf16.msra.mxu0 %v2328
    %2570 = vmatprep.subr.bf16.mxu0 0
    %2571 = vmatpush1.bf16.msra.mxu0 %v2327
    %2572 = vmatprep.subr.bf16.mxu0 0
    %2573 = vmatpush1.bf16.msra.mxu0 %v2326
    %2574 = vmatprep.subr.bf16.mxu0 0
    %2575 = vmatpush2.bf16.msra.mxu0 0
    %2576 = vmatprep.subr.bf16.mxu0 0
    %2577 = vmatpush2.bf16.msra.mxu0 0
    %2578 = vmatprep.subr.bf16.mxu0 0
    %2579 = vmatpush2.bf16.msra.mxu0 0
    %2580 = vmatprep.subr.bf16.mxu0 0
    %2581 = vmatpush2.bf16.msra.mxu0 0
    %2582 = vmatprep.subr.bf16.mxu0 0
    %2583 = vmatpush2.bf16.msra.mxu0 0
    %2584 = vmatprep.subr.bf16.mxu0 0
    %2585 = vmatpush2.bf16.msra.mxu0 0
    %2586 = vmatprep.subr.bf16.mxu0 0
    %2587 = vmatpush2.bf16.msra.mxu0 0
    %2588 = vmatprep.subr.bf16.mxu0 0
    %2589 = vmatpush2.bf16.msra.mxu0 0
    %2590 = vmatprep.mubr.bf16.mxu0 0
    %2591 = vmatmul.mubr.bf16.gmra.mxu0 %v2556
    %v2592 = vpop.f32.mrf.mxu0
    %v2593 = vadd.f32 %v108, %v2592
    %v2594 = vpop.f32.mrf.mxu0
    %v2595 = vpop.f32.mrf.mxu0
    %v2596 = vadd.f32 %v108, %v2595
    %v2597 = vpop.f32.mrf.mxu0
    %2598 = vmatprep.mubr.bf16.mxu0 0
    %2599 = vmatmul.mubr.bf16.gmra.mxu0 %v2557
    %v2600 = vpop.f32.mrf.mxu0
    %v2601 = vadd.f32 %v108, %v2600
    %v2602 = vpop.f32.mrf.mxu0
    %v2603 = vpop.f32.mrf.mxu0
    %v2604 = vadd.f32 %v108, %v2603
    %v2605 = vpop.f32.mrf.mxu0
    %2606 = vdwg.mxu0
    %v2607 = vadd.f32 %v2171, %v2593
    %v2608 = vadd.f32 %v2172, %v2596
    %v2609 = vadd.f32 %v2173, %v2601
    %v2610 = vadd.f32 %v2174, %v2604
    %2611 = vst.msk [vmem:[#allocation2] sm:$0xff] %vm110, %v2607
    %2612 = vst.msk [vmem:[#allocation2 + $0x8] sm:$0xff] %vm110, %v2608
    %2613 = vst.msk [vmem:[#allocation2 + $0x10] sm:$0xff] %vm110, %v2609
    %2614 = vst.msk [vmem:[#allocation2 + $0x18] sm:$0xff] %vm110, %v2610
    // Predicated region
    $region54: #{siglip_encoder_layer.1} parent=1 // pred_check
      _
    $region55: #{siglip_encoder_layer.1} parent=1 // pred_check_branch
      %2616 = sbr.rel (0) target = $region57
    $region56: #{siglip_encoder_layer.1} parent=1 // pred_region
      %s2618 = ssub.s32 512, 512
      %2619 = vsyncadd [#allocation3], %s2618
      %s2620 = sshll.u32 [#allocation2], 4
      %s2621 = int_to_ptr.vmem [resolvable:$true] %s2620
      %2626 = dma.vmem_to_hbm [thread:$0]  %s2621, 512, %s13, [#allocation3], 128, 128, 8
    $region57: #{siglip_encoder_layer.1} parent=1 // pred_fallthru
      _
    // Predicated region
    $region58: #{siglip_encoder_layer.1} parent=1 // pred_check
      _
    $region59: #{siglip_encoder_layer.1} parent=1 // pred_check_branch
      %2628 = sbr.rel (0) target = $region61
    $region60: #{siglip_encoder_layer.1} parent=1 // pred_region
      %2629 = dma.done [#allocation3], 512
    $region61: #{siglip_encoder_layer.1} parent=1 // pred_fallthru
      _
    %2630 = vsyncpa [#allocation3], 1

</llo_original>
